<compile_context>
chip_gen: v5e
topology: v5e:2x2
jax: 0.10.0
libtpu: 0.0.40
codegen_flags: <defaults>
</compile_context>

<pallas_src>
import functools

import jax
import jax.numpy as jnp
from jax.experimental import pallas as pl
from jax.experimental.pallas import tpu as pltpu


def _chamfer_kernel(x1t_ref, x2t_ref, d12_ref, i12_ref, d21_ref, i21_ref,
                    min12_acc, arg12_acc):
    # x1t_ref block: (1, 3, N)   generated points, lane-dense per coordinate
    # x2t_ref block: (1, 3, Mt)  reference-point M-tile, lane-dense per coord
    _, _, N = x1t_ref.shape
    _, _, Mt = x2t_ref.shape
    k = pl.program_id(1)
    num_k = pl.num_programs(1)

    x1 = x1t_ref[0].astype(jnp.float32)                       # (3, N) rows
    # Reference coords as (Mt, 1) columns: three small O(Mt) relayouts/step.
    x2x = jnp.transpose(x2t_ref[0, 0:1, :], (1, 0)).astype(jnp.float32)
    x2y = jnp.transpose(x2t_ref[0, 1:2, :], (1, 0)).astype(jnp.float32)
    x2z = jnp.transpose(x2t_ref[0, 2:3, :], (1, 0)).astype(jnp.float32)

    # Exact, non-negative squared distances, shape (Mt, N): 3 VPU passes.
    diff = x2x - x1[0:1, :]
    d = diff * diff
    diff = x2y - x1[1:2, :]
    d = d + diff * diff
    diff = x2z - x1[2:3, :]
    d = d + diff * diff

    # ---- xyz1 -> xyz2 : online min / first-argmin over the M (sublane) axis.
    sub_iota = jax.lax.broadcasted_iota(jnp.int32, (Mt, 1), 0)
    tmin = jnp.min(d, axis=0, keepdims=True)                               # (1, N)
    targ = jnp.min(jnp.where(d == tmin, sub_iota, Mt), axis=0, keepdims=True)
    targ = targ + k * Mt                                                   # (1, N)

    @pl.when(k == 0)
    def _():
        min12_acc[...] = jnp.full(min12_acc.shape, jnp.inf, min12_acc.dtype)
        arg12_acc[...] = jnp.zeros(arg12_acc.shape, arg12_acc.dtype)

    better = tmin < min12_acc[...]     # strict <  => first (lowest-k) index on ties
    arg12_acc[...] = jnp.where(better, targ, arg12_acc[...])
    min12_acc[...] = jnp.where(better, tmin, min12_acc[...])

    @pl.when(k == num_k - 1)
    def _():
        d12_ref[0, 0, :] = min12_acc[0, :]
        i12_ref[0, 0, :] = arg12_acc[0, :]

    # ---- xyz2 -> xyz1 : per-tile min / first-argmin over the N (lane) axis.
    lane_iota = jax.lax.broadcasted_iota(jnp.int32, (1, N), 1)
    min21 = jnp.min(d, axis=1, keepdims=True)                              # (Mt, 1)
    arg21 = jnp.min(jnp.where(d == min21, lane_iota, N), axis=1)           # (Mt,)
    d21_ref[0, 0, :] = min21[:, 0]
    i21_ref[0, 0, :] = arg21


def _round_up(x, m):
    return (x + m - 1) // m * m


def _vmem_budget_and_limit():
    """Generation-aware VMEM budget (bytes) and scoped-VMEM limit to request."""
    try:
        cap = int(pltpu.get_tpu_info().vmem_capacity_bytes)
    except Exception:
        cap = 64 << 20          # conservative fallback (v7x per-core VMEM)
    limit = min(int(cap * 0.75), 96 << 20)   # 48 MiB on v7x, 96 MiB on v5e/v6e
    budget = int(limit * 0.8)
    return budget, limit


def _pick_m_tile(N, M, budget_bytes):
    """Largest M-tile (multiple of 128 dividing M, or M) fitting the budget.

    Padding- and double-buffer-aware: inputs/outputs are counted at their
    padded (8, round_up(.,128)) VMEM footprint x2 buffers; compute temporaries
    (d, diff, argmin where/select) at ~4 padded (Mt, N) f32 slabs.
    """
    Np = _round_up(N, 128)

    def working_set(mt):
        mtp = _round_up(mt, 128)
        io_n = 2 * 8 * Np * 4 * 3          # x1t + d12 + i12 blocks, double-buffered
        io_m = 2 * 8 * mtp * 4 * 3         # x2t + d21 + i21 blocks, double-buffered
        scratch = 2 * 8 * Np * 4           # (1, N) min/arg accumulators
        temps = 4 * _round_up(mt, 8) * Np * 4
        return io_n + io_m + scratch + temps

    if M % 128 != 0:
        return M                            # block must equal the full dim then
    for mt in range(M, 127, -128):
        if M % mt == 0 and working_set(mt) <= budget_bytes:
            return mt
    return 128


def nndistance_pallas(xyz1, xyz2, m_tile=None):
    """Returns dist12 (B,N), dist21 (B,M), idx12 (B,N) int32, idx21 (B,M) int32."""
    B, N, _ = xyz1.shape
    _, M, _ = xyz2.shape

    # Lane-dense point clouds: coordinates on sublanes (3 -> pad 8), points on
    # lanes (contiguous DMA rows, no 128-lane padding of a size-3 minor dim).
    xyz1_t = jnp.transpose(xyz1, (0, 2, 1))        # (B, 3, N)
    xyz2_t = jnp.transpose(xyz2, (0, 2, 1))        # (B, 3, M)

    budget, vmem_limit = _vmem_budget_and_limit()
    Mt = m_tile if m_tile is not None else _pick_m_tile(N, M, budget)
    assert M % Mt == 0, (M, Mt)
    grid = (B, M // Mt)                            # batch parallel, M reduction

    out_shape = (
        jax.ShapeDtypeStruct((B, 1, N), jnp.float32),   # dist12
        jax.ShapeDtypeStruct((B, 1, N), jnp.int32),     # idx12
        jax.ShapeDtypeStruct((B, 1, M), jnp.float32),   # dist21
        jax.ShapeDtypeStruct((B, 1, M), jnp.int32),     # idx21
    )

    grid_spec = pltpu.PrefetchScalarGridSpec(
        num_scalar_prefetch=0,
        grid=grid,
        in_specs=[
            pl.BlockSpec((1, 3, N), lambda b, k: (b, 0, 0)),
            pl.BlockSpec((1, 3, Mt), lambda b, k: (b, 0, k)),
        ],
        out_specs=[
            pl.BlockSpec((1, 1, N), lambda b, k: (b, 0, 0)),
            pl.BlockSpec((1, 1, N), lambda b, k: (b, 0, 0)),
            pl.BlockSpec((1, 1, Mt), lambda b, k: (b, 0, k)),
            pl.BlockSpec((1, 1, Mt), lambda b, k: (b, 0, k)),
        ],
        scratch_shapes=[
            pltpu.VMEM((1, N), jnp.float32),    # running min (xyz1 -> xyz2)
            pltpu.VMEM((1, N), jnp.int32),      # running argmin (xyz1 -> xyz2)
        ],
    )

    cost = pl.CostEstimate(
        flops=13 * B * N * M,                 # 3 coord passes + min/cmp/select passes
        transcendentals=0,
        bytes_accessed=4 * B * 3 * (N + M) + 8 * B * (N + M),
    )

    d12, i12, d21, i21 = pl.pallas_call(
        _chamfer_kernel,
        out_shape=out_shape,
        grid_spec=grid_spec,
        compiler_params=pltpu.CompilerParams(
            dimension_semantics=("parallel", "arbitrary"),
            vmem_limit_bytes=vmem_limit),
        cost_estimate=cost,
    )(xyz1_t, xyz2_t)

    return (d12.reshape(B, N), d21.reshape(B, M),
            i12.reshape(B, N), i21.reshape(B, M))


@functools.partial(jax.jit, static_argnames=("beta", "gamma", "delta"))
def labeled_chamfer_distance(xyz1, xyz2, beta=1.0, gamma=1.0, delta=0.0):
    """Pallas equivalent of LabeledChamferDistance.forward (unlabeled path)."""
    P = xyz1.shape[1]
    dist12, dist21, idx12, idx21 = nndistance_pallas(xyz1, xyz2)
    loss_per_batch = (jnp.mean(dist12, axis=-1)
                      + jnp.max(dist12, axis=-1) * beta
                      + (gamma + delta * P) * jnp.mean(dist21, axis=-1))
    loss = jnp.mean(loss_per_batch)
    return loss, idx12, idx21


def _reference(xyz1, xyz2, beta=1.0, gamma=1.0, delta=0.0):
    # pure-JAX reference for correctness check
    d = jnp.sum((xyz1[:, :, None, :] - xyz2[:, None, :, :]) ** 2, axis=-1)  # (B,N,M)
    dist12 = jnp.min(d, axis=2)
    idx12 = jnp.argmin(d, axis=2).astype(jnp.int32)
    dist21 = jnp.min(d, axis=1)
    idx21 = jnp.argmin(d, axis=1).astype(jnp.int32)
    P = xyz1.shape[1]
    loss = jnp.mean(jnp.mean(dist12, -1) + jnp.max(dist12, -1) * beta
                    + (gamma + delta * P) * jnp.mean(dist21, -1))
    return loss, idx12, idx21


if __name__ == "__main__":
    key = jax.random.PRNGKey(0)
    k1, k2 = jax.random.split(key)
    B, N, M = 2, 128, 128
    xyz1 = jax.random.normal(k1, (B, N, 3), dtype=jnp.float32)  # generated points
    xyz2 = jax.random.normal(k2, (B, M, 3), dtype=jnp.float32)  # reference points

    loss, idx12, idx21 = labeled_chamfer_distance(xyz1, xyz2,
                                                  beta=1.0, gamma=1.0, delta=0.0)
    jax.block_until_ready((loss, idx12, idx21))

    ref_loss, ref_idx12, ref_idx21 = _reference(xyz1, xyz2)
    assert jnp.allclose(loss, ref_loss, rtol=1e-4, atol=1e-4), (loss, ref_loss)
    assert jnp.array_equal(idx12, ref_idx12)
    assert jnp.array_equal(idx21, ref_idx21)

    # Explicitly exercise the M-tiled online min/argmin reduction path.
    k3, k4 = jax.random.split(k2)
    xyz1b = jax.random.normal(k3, (2, 128, 3), dtype=jnp.float32)
    xyz2b = jax.random.normal(k4, (2, 256, 3), dtype=jnp.float32)
    d12, d21, i12, i21 = nndistance_pallas(xyz1b, xyz2b, m_tile=128)
    jax.block_until_ready((d12, d21, i12, i21))
    db = jnp.sum((xyz1b[:, :, None, :] - xyz2b[:, None, :, :]) ** 2, axis=-1)
    assert jnp.allclose(d12, jnp.min(db, 2), rtol=1e-5, atol=1e-5)
    assert jnp.allclose(d21, jnp.min(db, 1), rtol=1e-5, atol=1e-5)
    assert jnp.array_equal(i12, jnp.argmin(db, 2).astype(jnp.int32))
    assert jnp.array_equal(i21, jnp.argmin(db, 1).astype(jnp.int32))

    print("KERNEL_OK")
</pallas_src>

<mosaic_0001>
module attributes {stable_mosaic.version = 11 : i64} {
  func.func @_chamfer_kernel(%arg0: i32, %arg1: i32, %arg2: memref<1x3x128xf32, #tpu.memory_space<vmem>>, %arg3: memref<1x3x128xf32, #tpu.memory_space<vmem>>, %arg4: memref<1x1x128xf32, #tpu.memory_space<vmem>>, %arg5: memref<1x1x128xi32, #tpu.memory_space<vmem>>, %arg6: memref<1x1x128xf32, #tpu.memory_space<vmem>>, %arg7: memref<1x1x128xi32, #tpu.memory_space<vmem>>, %arg8: memref<1x128xf32, #tpu.memory_space<vmem>>, %arg9: memref<1x128xi32, #tpu.memory_space<vmem>>) attributes {dimension_semantics = [#tpu.dimension_semantics<parallel>, #tpu.dimension_semantics<arbitrary>], iteration_bounds = array<i64: 2, 1>, scalar_prefetch = 0 : i64, scratch_operands = 2 : i64, tpu.core_type = #tpu.core_type<tc>, window_params = [{transform_indices = @transform_0, window_bounds = array<i64: 1, 3, 128>}, {transform_indices = @transform_1, window_bounds = array<i64: 1, 3, 128>}, {transform_indices = @transform_2, window_bounds = array<i64: 1, 1, 128>}, {transform_indices = @transform_3, window_bounds = array<i64: 1, 1, 128>}, {transform_indices = @transform_4, window_bounds = array<i64: 1, 1, 128>}, {transform_indices = @transform_5, window_bounds = array<i64: 1, 1, 128>}]} {
    %c0 = arith.constant 0 : index
    %c0_0 = arith.constant 0 : index
    %c0_1 = arith.constant 0 : index
    %0 = vector.load %arg2[%c0, %c0_0, %c0_1] : memref<1x3x128xf32, #tpu.memory_space<vmem>>, vector<1x3x128xf32>
    %1 = vector.shape_cast %0 : vector<1x3x128xf32> to vector<3x128xf32>
    %c0_2 = arith.constant 0 : index
    %c0_3 = arith.constant 0 : index
    %c0_4 = arith.constant 0 : index
    %2 = vector.load %arg3[%c0_2, %c0_3, %c0_4] : memref<1x3x128xf32, #tpu.memory_space<vmem>>, vector<1x1x128xf32>
    %3 = vector.shape_cast %2 : vector<1x1x128xf32> to vector<1x128xf32>
    %4 = tpu.transpose %3, [1, 0] : vector<1x128xf32> -> vector<128x1xf32>
    %c0_5 = arith.constant 0 : index
    %c1 = arith.constant 1 : index
    %c0_6 = arith.constant 0 : index
    %5 = vector.load %arg3[%c0_5, %c1, %c0_6] : memref<1x3x128xf32, #tpu.memory_space<vmem>>, vector<1x1x128xf32>
    %6 = vector.shape_cast %5 : vector<1x1x128xf32> to vector<1x128xf32>
    %7 = tpu.transpose %6, [1, 0] : vector<1x128xf32> -> vector<128x1xf32>
    %c0_7 = arith.constant 0 : index
    %c2 = arith.constant 2 : index
    %c0_8 = arith.constant 0 : index
    %8 = vector.load %arg3[%c0_7, %c2, %c0_8] : memref<1x3x128xf32, #tpu.memory_space<vmem>>, vector<1x1x128xf32>
    %9 = vector.shape_cast %8 : vector<1x1x128xf32> to vector<1x128xf32>
    %10 = tpu.transpose %9, [1, 0] : vector<1x128xf32> -> vector<128x1xf32>
    %11 = vector.extract_strided_slice %1 {offsets = [0, 0], sizes = [1, 128], strides = [1, 1]} : vector<3x128xf32> to vector<1x128xf32>
    %12 = vector.broadcast %4 : vector<128x1xf32> to vector<128x128xf32>
    %13 = vector.broadcast %11 : vector<1x128xf32> to vector<128x128xf32>
    %14 = arith.subf %12, %13 : vector<128x128xf32>
    %15 = arith.mulf %14, %14 : vector<128x128xf32>
    %16 = vector.extract_strided_slice %1 {offsets = [1, 0], sizes = [1, 128], strides = [1, 1]} : vector<3x128xf32> to vector<1x128xf32>
    %17 = vector.broadcast %7 : vector<128x1xf32> to vector<128x128xf32>
    %18 = vector.broadcast %16 : vector<1x128xf32> to vector<128x128xf32>
    %19 = arith.subf %17, %18 : vector<128x128xf32>
    %20 = arith.mulf %19, %19 : vector<128x128xf32>
    %21 = arith.addf %15, %20 : vector<128x128xf32>
    %22 = vector.extract_strided_slice %1 {offsets = [2, 0], sizes = [1, 128], strides = [1, 1]} : vector<3x128xf32> to vector<1x128xf32>
    %23 = vector.broadcast %10 : vector<128x1xf32> to vector<128x128xf32>
    %24 = vector.broadcast %22 : vector<1x128xf32> to vector<128x128xf32>
    %25 = arith.subf %23, %24 : vector<128x128xf32>
    %26 = arith.mulf %25, %25 : vector<128x128xf32>
    %27 = arith.addf %21, %26 : vector<128x128xf32>
    %28 = tpu.iota {dimensions = array<i32: 0>} : vector<128x1xi32>
    %cst = arith.constant dense<0x7F800000> : vector<128xf32>
    %29 = vector.multi_reduction <minimumf>, %27, %cst [0] : vector<128x128xf32> to vector<128xf32>
    %30 = vector.shape_cast %29 : vector<128xf32> to vector<1x128xf32>
    %31 = vector.broadcast %30 : vector<1x128xf32> to vector<128x128xf32>
    %32 = arith.cmpf oeq, %27, %31 : vector<128x128xf32>
    %c128_i32 = arith.constant 128 : i32
    %33 = vector.shape_cast %28 : vector<128x1xi32> to vector<128x1xi32>
    %34 = vector.broadcast %33 : vector<128x1xi32> to vector<128x128xi32>
    %35 = vector.broadcast %c128_i32 : i32 to vector<128x128xi32>
    %36 = arith.select %32, %34, %35 : vector<128x128xi1>, vector<128x128xi32>
    %cst_9 = arith.constant dense<2147483647> : vector<128xi32>
    %37 = vector.multi_reduction <minsi>, %36, %cst_9 [0] : vector<128x128xi32> to vector<128xi32>
    %38 = vector.shape_cast %37 : vector<128xi32> to vector<1x128xi32>
    %c128_i32_10 = arith.constant 128 : i32
    %39 = arith.muli %arg1, %c128_i32_10 : i32
    %40 = vector.broadcast %39 : i32 to vector<1x128xi32>
    %41 = arith.addi %38, %40 : vector<1x128xi32>
    %c0_i32 = arith.constant 0 : i32
    %42 = arith.cmpi eq, %arg1, %c0_i32 : i32
    %43 = arith.extui %42 : i1 to i32
    %c0_i32_11 = arith.constant 0 : i32
    %44 = arith.cmpi ne, %43, %c0_i32_11 : i32
    scf.if %44 {
      %cst_33 = arith.constant 0x7F800000 : f32
      %73 = vector.broadcast %cst_33 : f32 to vector<1x128xf32>
      %c0_34 = arith.constant 0 : index
      %c0_35 = arith.constant 0 : index
      %74 = vector.load %arg8[%c0_34, %c0_35] : memref<1x128xf32, #tpu.memory_space<vmem>>, vector<1x128xf32>
      tpu.vector_store %arg8[%c0_34, %c0_35], %73 {strides = array<i32>} : memref<1x128xf32, #tpu.memory_space<vmem>>, vector<1x128xf32>,
      %c0_i32_36 = arith.constant 0 : i32
      %75 = vector.broadcast %c0_i32_36 : i32 to vector<1x128xi32>
      %c0_37 = arith.constant 0 : index
      %c0_38 = arith.constant 0 : index
      %76 = vector.load %arg9[%c0_37, %c0_38] : memref<1x128xi32, #tpu.memory_space<vmem>>, vector<1x128xi32>
      tpu.vector_store %arg9[%c0_37, %c0_38], %75 {strides = array<i32>} : memref<1x128xi32, #tpu.memory_space<vmem>>, vector<1x128xi32>,
    } else {
    }
    %c0_12 = arith.constant 0 : index
    %c0_13 = arith.constant 0 : index
    %45 = vector.load %arg8[%c0_12, %c0_13] : memref<1x128xf32, #tpu.memory_space<vmem>>, vector<1x128xf32>
    %46 = arith.cmpf olt, %30, %45 : vector<1x128xf32>
    %c0_14 = arith.constant 0 : index
    %c0_15 = arith.constant 0 : index
    %47 = vector.load %arg9[%c0_14, %c0_15] : memref<1x128xi32, #tpu.memory_space<vmem>>, vector<1x128xi32>
    %48 = arith.select %46, %41, %47 : vector<1x128xi1>, vector<1x128xi32>
    %c0_16 = arith.constant 0 : index
    %c0_17 = arith.constant 0 : index
    %49 = vector.load %arg9[%c0_16, %c0_17] : memref<1x128xi32, #tpu.memory_space<vmem>>, vector<1x128xi32>
    tpu.vector_store %arg9[%c0_16, %c0_17], %48 {strides = array<i32>} : memref<1x128xi32, #tpu.memory_space<vmem>>, vector<1x128xi32>,
    %c0_18 = arith.constant 0 : index
    %c0_19 = arith.constant 0 : index
    %50 = vector.load %arg8[%c0_18, %c0_19] : memref<1x128xf32, #tpu.memory_space<vmem>>, vector<1x128xf32>
    %51 = arith.select %46, %30, %50 : vector<1x128xi1>, vector<1x128xf32>
    %c0_20 = arith.constant 0 : index
    %c0_21 = arith.constant 0 : index
    %52 = vector.load %arg8[%c0_20, %c0_21] : memref<1x128xf32, #tpu.memory_space<vmem>>, vector<1x128xf32>
    tpu.vector_store %arg8[%c0_20, %c0_21], %51 {strides = array<i32>} : memref<1x128xf32, #tpu.memory_space<vmem>>, vector<1x128xf32>,
    %c0_i32_22 = arith.constant 0 : i32
    %53 = arith.cmpi eq, %arg1, %c0_i32_22 : i32
    %54 = arith.extui %53 : i1 to i32
    %c0_i32_23 = arith.constant 0 : i32
    %55 = arith.cmpi ne, %54, %c0_i32_23 : i32
    scf.if %55 {
      %c0_33 = arith.constant 0 : index
      %c0_34 = arith.constant 0 : index
      %73 = vector.load %arg8[%c0_33, %c0_34] : memref<1x128xf32, #tpu.memory_space<vmem>>, vector<1x128xf32>
      %74 = vector.shape_cast %73 : vector<1x128xf32> to vector<128xf32>
      %c0_35 = arith.constant 0 : index
      %c0_36 = arith.constant 0 : index
      %c0_37 = arith.constant 0 : index
      %75 = vector.load %arg4[%c0_35, %c0_36, %c0_37] : memref<1x1x128xf32, #tpu.memory_space<vmem>>, vector<1x1x128xf32>
      %76 = vector.shape_cast %75 : vector<1x1x128xf32> to vector<128xf32>
      %77 = vector.shape_cast %74 : vector<128xf32> to vector<1x1x128xf32>
      tpu.vector_store %arg4[%c0_35, %c0_36, %c0_37], %77 {strides = array<i32>} : memref<1x1x128xf32, #tpu.memory_space<vmem>>, vector<1x1x128xf32>,
      %c0_38 = arith.constant 0 : index
      %c0_39 = arith.constant 0 : index
      %78 = vector.load %arg9[%c0_38, %c0_39] : memref<1x128xi32, #tpu.memory_space<vmem>>, vector<1x128xi32>
      %79 = vector.shape_cast %78 : vector<1x128xi32> to vector<128xi32>
      %c0_40 = arith.constant 0 : index
      %c0_41 = arith.constant 0 : index
      %c0_42 = arith.constant 0 : index
      %80 = vector.load %arg5[%c0_40, %c0_41, %c0_42] : memref<1x1x128xi32, #tpu.memory_space<vmem>>, vector<1x1x128xi32>
      %81 = vector.shape_cast %80 : vector<1x1x128xi32> to vector<128xi32>
      %82 = vector.shape_cast %79 : vector<128xi32> to vector<1x1x128xi32>
      tpu.vector_store %arg5[%c0_40, %c0_41, %c0_42], %82 {strides = array<i32>} : memref<1x1x128xi32, #tpu.memory_space<vmem>>, vector<1x1x128xi32>,
    } else {
    }
    %56 = tpu.iota {dimensions = array<i32: 1>} : vector<1x128xi32>
    %cst_24 = arith.constant dense<0x7F800000> : vector<128xf32>
    %57 = vector.multi_reduction <minimumf>, %27, %cst_24 [1] : vector<128x128xf32> to vector<128xf32>
    %58 = vector.shape_cast %57 : vector<128xf32> to vector<128x1xf32>
    %59 = vector.broadcast %58 : vector<128x1xf32> to vector<128x128xf32>
    %60 = arith.cmpf oeq, %27, %59 : vector<128x128xf32>
    %c128_i32_25 = arith.constant 128 : i32
    %61 = vector.shape_cast %56 : vector<1x128xi32> to vector<1x128xi32>
    %62 = vector.broadcast %61 : vector<1x128xi32> to vector<128x128xi32>
    %63 = vector.broadcast %c128_i32_25 : i32 to vector<128x128xi32>
    %64 = arith.select %60, %62, %63 : vector<128x128xi1>, vector<128x128xi32>
    %cst_26 = arith.constant dense<2147483647> : vector<128xi32>
    %65 = vector.multi_reduction <minsi>, %64, %cst_26 [1] : vector<128x128xi32> to vector<128xi32>
    %66 = vector.shape_cast %58 : vector<128x1xf32> to vector<128xf32>
    %c0_27 = arith.constant 0 : index
    %c0_28 = arith.constant 0 : index
    %c0_29 = arith.constant 0 : index
    %67 = vector.load %arg6[%c0_27, %c0_28, %c0_29] : memref<1x1x128xf32, #tpu.memory_space<vmem>>, vector<1x1x128xf32>
    %68 = vector.shape_cast %67 : vector<1x1x128xf32> to vector<128xf32>
    %69 = vector.shape_cast %66 : vector<128xf32> to vector<1x1x128xf32>
    tpu.vector_store %arg6[%c0_27, %c0_28, %c0_29], %69 {strides = array<i32>} : memref<1x1x128xf32, #tpu.memory_space<vmem>>, vector<1x1x128xf32>,
    %c0_30 = arith.constant 0 : index
    %c0_31 = arith.constant 0 : index
    %c0_32 = arith.constant 0 : index
    %70 = vector.load %arg7[%c0_30, %c0_31, %c0_32] : memref<1x1x128xi32, #tpu.memory_space<vmem>>, vector<1x1x128xi32>
    %71 = vector.shape_cast %70 : vector<1x1x128xi32> to vector<128xi32>
    %72 = vector.shape_cast %65 : vector<128xi32> to vector<1x1x128xi32>
    tpu.vector_store %arg7[%c0_30, %c0_31, %c0_32], %72 {strides = array<i32>} : memref<1x1x128xi32, #tpu.memory_space<vmem>>, vector<1x1x128xi32>,
    return
  }
  func.func @transform_0(%arg0: i32, %arg1: i32) -> (i32, i32, i32) {
    %c0_i32 = arith.constant 0 : i32
    %c0_i32_0 = arith.constant 0 : i32
    %c0_i32_1 = arith.constant 0 : i32
    return %arg0, %c0_i32, %c0_i32_0 : i32, i32, i32
  }
  func.func @transform_1(%arg0: i32, %arg1: i32) -> (i32, i32, i32) {
    %c0_i32 = arith.constant 0 : i32
    %c0_i32_0 = arith.constant 0 : i32
    return %arg0, %c0_i32, %arg1 : i32, i32, i32
  }
  func.func @transform_2(%arg0: i32, %arg1: i32) -> (i32, i32, i32) {
    %c0_i32 = arith.constant 0 : i32
    %c0_i32_0 = arith.constant 0 : i32
    %c0_i32_1 = arith.constant 0 : i32
    return %arg0, %c0_i32, %c0_i32_0 : i32, i32, i32
  }
  func.func @transform_3(%arg0: i32, %arg1: i32) -> (i32, i32, i32) {
    %c0_i32 = arith.constant 0 : i32
    %c0_i32_0 = arith.constant 0 : i32
    %c0_i32_1 = arith.constant 0 : i32
    return %arg0, %c0_i32, %c0_i32_0 : i32, i32, i32
  }
  func.func @transform_4(%arg0: i32, %arg1: i32) -> (i32, i32, i32) {
    %c0_i32 = arith.constant 0 : i32
    %c0_i32_0 = arith.constant 0 : i32
    return %arg0, %c0_i32, %arg1 : i32, i32, i32
  }
  func.func @transform_5(%arg0: i32, %arg1: i32) -> (i32, i32, i32) {
    %c0_i32 = arith.constant 0 : i32
    %c0_i32_0 = arith.constant 0 : i32
    return %arg0, %c0_i32, %arg1 : i32, i32, i32
  }
}

</mosaic_0001>

<llo_original>
// kernel: labeled_chamfer_distance.1
$region0: #{labeled_chamfer_distance.1}
  #allocation0 [shape = 'u32[]', space=smem, size = 0x4, offset = 0x4, fixed_abs, tag = 'smem constant byte address 0x4 - core index']
  #allocation1 [shape = 'u32[72,128]{1,0:T(1,128)}', space=vmem, size = 0x9000, scoped, tag = 'internal scratch']
  #allocation2 [shape = 'f32[1,128]{1,0:T(1,128)}', space=vmem, size = 0x200, scoped, tag = 'scratch operand']
  #allocation3 [shape = 's32[1,128]{1,0:T(1,128)}', space=vmem, size = 0x200, scoped, tag = 'scratch operand']
  %s0 = inlined_call_operand.vmem [shape: f32[2,3,128], index: 0, kind: input, shape index: {}]
  %s1 = inlined_call_operand.vmem [shape: f32[2,3,128], index: 1, kind: input, shape index: {}]
  %s2 = inlined_call_operand.vmem [shape: f32[2,1,128], index: 2, kind: output, shape index: {0}]
  %s3 = inlined_call_operand.hbm [shape: s32[2,1,128], index: 3, kind: output, shape index: {1}]
  %s4 = inlined_call_operand.vmem [shape: f32[2,1,128], index: 4, kind: output, shape index: {2}]
  %s5 = inlined_call_operand.hbm [shape: s32[2,1,128], index: 5, kind: output, shape index: {3}]
  %6 = xla_tuple %s2, %s3, %s4, %s5
  %s7 = sld [smem:[#allocation0]]
  $region73: #{labeled_chamfer_distance.1} parent=0
    _
  %s9 = ssub.s32 1, %s7
  %s10 = scalar_select 0, %s9, %s7
  $region1: #{labeled_chamfer_distance.1} parent=0
    #allocation4 [shape = 'u8[1024]{0}', space=vmem, size = 0x400, scoped, tag = 'output window, operand 1']
    #allocation5 [shape = 's32[2]{0}', space=sflag, size = 0x8, scoped, tag = 'scoped memory for labeled_chamfer_distance.1']
    #allocation6 [shape = 'u8[1024]{0}', space=vmem, size = 0x400, scoped, tag = 'output window, operand 3']
    #allocation7 [shape = 's32[2]{0}', space=sflag, size = 0x8, scoped, tag = 'scoped memory for labeled_chamfer_distance.1']
    %11 = vsyncpa [#allocation5], 0
    %s12 = scalar_lea.sflag [#allocation5], 1
    %13 = vsyncpa %s12, 0
    %14 = vsyncpa [#allocation7], 0
    %s15 = scalar_lea.sflag [#allocation7], 1
    %16 = vsyncpa %s15, 0
    loop: start=0, step=1, limit=4
    $region2: #{labeled_chamfer_distance.1} parent=1 // loop_pre_header
      _
    $region3: #{labeled_chamfer_distance.1} parent=1 // loop_header
      %s18 = sphi 0, %s22
      %p19 = scmp.ge.s32.totalorder %s18, 4
      %s25 = sphi 0, %s37
      %s26 = sphi 0, %s33
      %s27 = sphi 0, %s25
      %s28 = sphi 0, %s26
      %s29 = sphi 0, %s27
      %s30 = sphi 0, %s28
      %s40 = sphi 0, %s42
      %s43 = sphi 0, %s40
      %s44 = sphi 0, %s43
      %s60 = sphi 0, %s44
      %s68 = sphi 0, %s70
      %s71 = sphi 0, %s68
      %s72 = sphi 0, %s71
      %s88 = sphi 0, %s72
      %s94 = sphi 0, %s96
      %s97 = sphi 0, %s94
      %s98 = sphi 0, %s97
      %s114 = sphi 0, %s98
      %s120 = sphi 0, %s122
      %s123 = sphi 0, %s120
      %s124 = sphi 0, %s123
      %s140 = sphi 0, %s124
      %s148 = sphi 0, %s150
      %s151 = sphi 0, %s148
      %s152 = sphi 0, %s151
      %s168 = sphi 0, %s152
      %s176 = sphi 0, %s178
      %s179 = sphi 0, %s176
      %s180 = sphi 0, %s179
      %s196 = sphi 0, %s180
    $region4: #{labeled_chamfer_distance.1} parent=1 // loop_header_branch
      %21 = sbr.rel (%p19) target = $region8
    $region5: #{labeled_chamfer_distance.1} parent=1 // loop_body
      %s23 = ssub.s32 %s18, 1
      %s24 = ssub.s32 %s18, 2
      %s31 = sadd.s32 1, %s26
      %p32 = scmp.ge.s32.totalorder %s31, 1
      %s33 = scalar_select %p32, 0, %s31
      %s34 = sadd.s32 1, %s25
      %s35 = scalar_select %p32, %s34, %s25
      %p36 = scmp.ge.s32.totalorder %s35, 2
      %s37 = scalar_select %p36, 0, %s35
      %s38 = ssub.s32 %s25, %s37
      %p39 = scmp.eq.s32.totalorder %s38, 0
      %s41 = sadd.s32 %s40, 1
      %s42 = scalar_select %p39, %s40, %s41
      %p45 = pneg %p39
      %p46 = scmp.eq.s32.totalorder %s18, 1
      %p47 = por %p45, %p46
      %p48 = scmp.ne.s32.totalorder %s40, %s43
      %p49 = scmp.eq.s32.totalorder %s18, 0
      %p50 = por %p48, %p49
      %p51 = scmp.ne.s32.totalorder %s40, %s43
      %p52 = scmp.eq.s32.totalorder %s23, 1
      %p53 = por %p51, %p52
      %p54 = scmp.ne.s32.totalorder %s43, %s44
      %p55 = scmp.eq.s32.totalorder %s23, 0
      %p56 = por %p54, %p55
      %p57 = scmp.ne.s32.totalorder %s43, %s44
      %p58 = scmp.eq.s32.totalorder %s24, 1
      %p59 = por %p57, %p58
      %p61 = scmp.ne.s32.totalorder %s44, %s60
      %p62 = scmp.eq.s32.totalorder %s24, 0
      %p63 = por %p61, %p62
      %s64 = ssub.s32 %s25, %s37
      %s65 = ssub.s32 %s26, %s33
      %s66 = sor.u32 %s64, %s65
      %p67 = scmp.eq.s32.totalorder %s66, 0
      %s69 = sadd.s32 %s68, 1
      %s70 = scalar_select %p67, %s68, %s69
      %p73 = pneg %p67
      %p74 = scmp.eq.s32.totalorder %s18, 1
      %p75 = por %p73, %p74
      %p76 = scmp.ne.s32.totalorder %s68, %s71
      %p77 = scmp.eq.s32.totalorder %s18, 0
      %p78 = por %p76, %p77
      %p79 = scmp.ne.s32.totalorder %s68, %s71
      %p80 = scmp.eq.s32.totalorder %s23, 1
      %p81 = por %p79, %p80
      %p82 = scmp.ne.s32.totalorder %s71, %s72
      %p83 = scmp.eq.s32.totalorder %s23, 0
      %p84 = por %p82, %p83
      %p85 = scmp.ne.s32.totalorder %s71, %s72
      %p86 = scmp.eq.s32.totalorder %s24, 1
      %p87 = por %p85, %p86
      %p89 = scmp.ne.s32.totalorder %s72, %s88
      %p90 = scmp.eq.s32.totalorder %s24, 0
      %p91 = por %p89, %p90
      %s92 = ssub.s32 %s25, %s37
      %p93 = scmp.eq.s32.totalorder %s92, 0
      %s95 = sadd.s32 %s94, 1
      %s96 = scalar_select %p93, %s94, %s95
      %p99 = pneg %p93
      %p100 = scmp.eq.s32.totalorder %s18, 1
      %p101 = por %p99, %p100
      %p102 = scmp.ne.s32.totalorder %s94, %s97
      %p103 = scmp.eq.s32.totalorder %s18, 0
      %p104 = por %p102, %p103
      %p105 = scmp.ne.s32.totalorder %s94, %s97
      %p106 = scmp.eq.s32.totalorder %s23, 1
      %p107 = por %p105, %p106
      %p108 = scmp.ne.s32.totalorder %s97, %s98
      %p109 = scmp.eq.s32.totalorder %s23, 0
      %p110 = por %p108, %p109
      %p111 = scmp.ne.s32.totalorder %s97, %s98
      %p112 = scmp.eq.s32.totalorder %s24, 1
      %p113 = por %p111, %p112
      %p115 = scmp.ne.s32.totalorder %s98, %s114
      %p116 = scmp.eq.s32.totalorder %s24, 0
      %p117 = por %p115, %p116
      %s118 = ssub.s32 %s25, %s37
      %p119 = scmp.eq.s32.totalorder %s118, 0
      %s121 = sadd.s32 %s120, 1
      %s122 = scalar_select %p119, %s120, %s121
      %p125 = pneg %p119
      %p126 = scmp.eq.s32.totalorder %s18, 1
      %p127 = por %p125, %p126
      %p128 = scmp.ne.s32.totalorder %s120, %s123
      %p129 = scmp.eq.s32.totalorder %s18, 0
      %p130 = por %p128, %p129
      %p131 = scmp.ne.s32.totalorder %s120, %s123
      %p132 = scmp.eq.s32.totalorder %s23, 1
      %p133 = por %p131, %p132
      %p134 = scmp.ne.s32.totalorder %s123, %s124
      %p135 = scmp.eq.s32.totalorder %s23, 0
      %p136 = por %p134, %p135
      %p137 = scmp.ne.s32.totalorder %s123, %s124
      %p138 = scmp.eq.s32.totalorder %s24, 1
      %p139 = por %p137, %p138
      %p141 = scmp.ne.s32.totalorder %s124, %s140
      %p142 = scmp.eq.s32.totalorder %s24, 0
      %p143 = por %p141, %p142
      %s144 = ssub.s32 %s25, %s37
      %s145 = ssub.s32 %s26, %s33
      %s146 = sor.u32 %s144, %s145
      %p147 = scmp.eq.s32.totalorder %s146, 0
      %s149 = sadd.s32 %s148, 1
      %s150 = scalar_select %p147, %s148, %s149
      %p153 = pneg %p147
      %p154 = scmp.eq.s32.totalorder %s18, 1
      %p155 = por %p153, %p154
      %p156 = scmp.ne.s32.totalorder %s148, %s151
      %p157 = scmp.eq.s32.totalorder %s18, 0
      %p158 = por %p156, %p157
      %p159 = scmp.ne.s32.totalorder %s148, %s151
      %p160 = scmp.eq.s32.totalorder %s23, 1
      %p161 = por %p159, %p160
      %p162 = scmp.ne.s32.totalorder %s151, %s152
      %p163 = scmp.eq.s32.totalorder %s23, 0
      %p164 = por %p162, %p163
      %p165 = scmp.ne.s32.totalorder %s151, %s152
      %p166 = scmp.eq.s32.totalorder %s24, 1
      %p167 = por %p165, %p166
      %p169 = scmp.ne.s32.totalorder %s152, %s168
      %p170 = scmp.eq.s32.totalorder %s24, 0
      %p171 = por %p169, %p170
      %s172 = ssub.s32 %s25, %s37
      %s173 = ssub.s32 %s26, %s33
      %s174 = sor.u32 %s172, %s173
      %p175 = scmp.eq.s32.totalorder %s174, 0
      %s177 = sadd.s32 %s176, 1
      %s178 = scalar_select %p175, %s176, %s177
      %p181 = pneg %p175
      %p182 = scmp.eq.s32.totalorder %s18, 1
      %p183 = por %p181, %p182
      %p184 = scmp.ne.s32.totalorder %s176, %s179
      %p185 = scmp.eq.s32.totalorder %s18, 0
      %p186 = por %p184, %p185
      %p187 = scmp.ne.s32.totalorder %s176, %s179
      %p188 = scmp.eq.s32.totalorder %s23, 1
      %p189 = por %p187, %p188
      %p190 = scmp.ne.s32.totalorder %s179, %s180
      %p191 = scmp.eq.s32.totalorder %s23, 0
      %p192 = por %p190, %p191
      %p193 = scmp.ne.s32.totalorder %s179, %s180
      %p194 = scmp.eq.s32.totalorder %s24, 1
      %p195 = por %p193, %p194
      %p197 = scmp.ne.s32.totalorder %s180, %s196
      %p198 = scmp.eq.s32.totalorder %s24, 0
      %p199 = por %p197, %p198
      %p200 = scmp.le.s32.totalorder 1, %s18
      %p201 = scmp.lt.s32.totalorder %s18, 3
      %p202 = pnand %p200, %p201
      %p203 = pneg %p202
      // Predicated region
      $region9: #{labeled_chamfer_distance.1} parent=5 // pred_check
        _
      $region10: #{labeled_chamfer_distance.1} parent=5 // pred_check_branch
        %205 = sbr.rel (%p202) target = $region12
      $region11: #{labeled_chamfer_distance.1} parent=5 // pred_region
        %s206 = ssub.s32 %s18, 1
      $region12: #{labeled_chamfer_distance.1} parent=5 // pred_fallthru
        _
      %p207 = scmp.lt.s32.totalorder %s18, 2
      // Predicated region
      $region13: #{labeled_chamfer_distance.1} parent=5 // pred_check
        %p208 = pneg %p207
      $region14: #{labeled_chamfer_distance.1} parent=5 // pred_check_branch
        %210 = sbr.rel (%p208) target = $region16
      $region15: #{labeled_chamfer_distance.1} parent=5 // pred_region
        // Predicated region
        $region17: #{labeled_chamfer_distance.1} parent=15 // pred_check
          %p211 = pneg %p50
        $region18: #{labeled_chamfer_distance.1} parent=15 // pred_check_branch
          %213 = sbr.rel (%p211) target = $region20
        $region19: #{labeled_chamfer_distance.1} parent=15 // pred_region
          %p214 = scmp.lt.s32.totalorder %s25, 1
          %s215 = scalar_select %p214, %s25, 1
          %s216 = smul.addr %s215, 4
          %s217 = scalar_lea.vmem %s0, %s216
        $region20: #{labeled_chamfer_distance.1} parent=15 // pred_fallthru
          _
        // Predicated region
        $region21: #{labeled_chamfer_distance.1} parent=15 // pred_check
          %p218 = pneg %p78
        $region22: #{labeled_chamfer_distance.1} parent=15 // pred_check_branch
          %220 = sbr.rel (%p218) target = $region24
        $region23: #{labeled_chamfer_distance.1} parent=15 // pred_region
          %p221 = scmp.lt.s32.totalorder %s25, 1
          %s222 = scalar_select %p221, %s25, 1
          %p223 = scmp.lt.s32.totalorder %s26, 0
          %s224 = scalar_select %p223, %s26, 0
          %s225 = sadd.s32 %s224, %s222
          %s226 = smul.addr %s225, 4
          %s227 = scalar_lea.vmem %s1, %s226
        $region24: #{labeled_chamfer_distance.1} parent=15 // pred_fallthru
          _
      $region16: #{labeled_chamfer_distance.1} parent=5 // pred_fallthru
        _
      %p228 = scmp.le.s32.totalorder 1, %s18
      %p229 = scmp.lt.s32.totalorder %s18, 3
      %p230 = pnand %p228, %p229
      %p231 = pneg %p230
      // Predicated region
      $region25: #{labeled_chamfer_distance.1} parent=5 // pred_check
        _
      $region26: #{labeled_chamfer_distance.1} parent=5 // pred_check_branch
        %233 = sbr.rel (%p230) target = $region28
      $region27: #{labeled_chamfer_distance.1} parent=5 // pred_region
        %s234 = ssub.s32 %s18, 1
        %p235 = scmp.lt.s32.totalorder %s27, 1
        %s236 = scalar_select %p235, %s27, 1
        %s237 = smul.addr %s236, 4
        %s238 = scalar_lea.vmem %s0, %s237
        %p239 = pneg %p56
        %p240 = pneg %p53
        %p241 = scmp.lt.s32.totalorder %s27, 1
        %s242 = scalar_select %p241, %s27, 1
        %p243 = scmp.lt.s32.totalorder %s28, 0
        %s244 = scalar_select %p243, %s28, 0
        %s245 = sadd.s32 %s244, %s242
        %s246 = smul.addr %s245, 4
        %s247 = scalar_lea.vmem %s1, %s246
        %p248 = pneg %p84
        %p249 = pneg %p81
        %p250 = pneg %p110
        %p251 = pneg %p107
        %p252 = scmp.lt.s32.totalorder %s27, 1
        %s253 = scalar_select %p252, %s27, 1
        %s254 = scalar_lea.vmem %s2, %s253
        %p255 = pneg %p136
        %p256 = pneg %p133
        %s257 = sand.u32 %s123, 1
        %s258 = scalar_lea.sflag [#allocation5], %s257
        %s259 = sand.u32 %s123, 1
        %s260 = scalar_lea.vmem [#allocation4], %s259
        %p261 = pneg %p164
        %p262 = pneg %p161
        %p263 = scmp.lt.s32.totalorder %s27, 1
        %s264 = scalar_select %p263, %s27, 1
        %p265 = scmp.lt.s32.totalorder %s28, 0
        %s266 = scalar_select %p265, %s28, 0
        %s267 = sadd.s32 %s266, %s264
        %s268 = scalar_lea.vmem %s4, %s267
        %p269 = pneg %p192
        %p270 = pneg %p189
        %s271 = sand.u32 %s179, 1
        %s272 = scalar_lea.sflag [#allocation7], %s271
        %s273 = sand.u32 %s179, 1
        %s274 = scalar_lea.vmem [#allocation6], %s273
        %p275 = scmp.lt.s32.totalorder %s27, 1
        %s276 = scalar_select %p275, %s27, 1
        %s277 = smul.addr %s276, 4
        %s278 = scalar_lea.vmem %s0, %s277
        %p279 = scmp.lt.s32.totalorder %s27, 1
        %s280 = scalar_select %p279, %s27, 1
        %p281 = scmp.lt.s32.totalorder %s28, 0
        %s282 = scalar_select %p281, %s28, 0
        %s283 = sadd.s32 %s282, %s280
        %s284 = smul.addr %s283, 4
        %s285 = scalar_lea.vmem %s1, %s284
        %p286 = scmp.lt.s32.totalorder %s27, 1
        %s287 = scalar_select %p286, %s27, 1
        %s288 = scalar_lea.vmem %s2, %s287
        %p289 = scmp.lt.s32.totalorder %s27, 1
        %s290 = scalar_select %p289, %s27, 1
        %p291 = scmp.lt.s32.totalorder %s28, 0
        %s292 = scalar_select %p291, %s28, 0
        %s293 = sadd.s32 %s292, %s290
        %s294 = scalar_lea.vmem %s4, %s293
        %v295 = vld [vmem:[%s278] sm:$0x7]
        %v296 = vld [vmem:[%s285] sm:$0x1]
        %297 = vxpose.xlu0.b32.start [1/16] %v296, 128
        %298 = vxpose.xlu0.b32.cont [2/16] 0.0, 128
        %299 = vxpose.xlu0.b32.cont [3/16] 0.0, 128
        %300 = vxpose.xlu0.b32.cont [4/16] 0.0, 128
        %301 = vxpose.xlu0.b32.cont [5/16] 0.0, 128
        %302 = vxpose.xlu0.b32.cont [6/16] 0.0, 128
        %303 = vxpose.xlu0.b32.cont [7/16] 0.0, 128
        %304 = vxpose.xlu0.b32.cont [8/16] 0.0, 128
        %305 = vxpose.xlu0.b32.cont [9/16] 0.0, 128
        %306 = vxpose.xlu0.b32.cont [10/16] 0.0, 128
        %307 = vxpose.xlu0.b32.cont [11/16] 0.0, 128
        %308 = vxpose.xlu0.b32.cont [12/16] 0.0, 128
        %309 = vxpose.xlu0.b32.cont [13/16] 0.0, 128
        %310 = vxpose.xlu0.b32.cont [14/16] 0.0, 128
        %311 = vxpose.xlu0.b32.cont [15/16] 0.0, 128
        %312 = vxpose.xlu0.b32.end [16/16] 0.0, 128
        %v313 = vpop.trf.xlu0
        %v314 = vpop.trf.xlu0
        %v315 = vpop.trf.xlu0
        %v316 = vpop.trf.xlu0
        %v317 = vpop.trf.xlu0
        %v318 = vpop.trf.xlu0
        %v319 = vpop.trf.xlu0
        %v320 = vpop.trf.xlu0
        %v321 = vpop.trf.xlu0
        %v322 = vpop.trf.xlu0
        %v323 = vpop.trf.xlu0
        %v324 = vpop.trf.xlu0
        %v325 = vpop.trf.xlu0
        %v326 = vpop.trf.xlu0
        %v327 = vpop.trf.xlu0
        %v328 = vpop.trf.xlu0
        %v329 = vld [vmem:[%s285 + $0x1] sm:$0x1]
        %330 = vxpose.xlu0.b32.start [1/16] %v329, 128
        %331 = vxpose.xlu0.b32.cont [2/16] 0.0, 128
        %332 = vxpose.xlu0.b32.cont [3/16] 0.0, 128
        %333 = vxpose.xlu0.b32.cont [4/16] 0.0, 128
        %334 = vxpose.xlu0.b32.cont [5/16] 0.0, 128
        %335 = vxpose.xlu0.b32.cont [6/16] 0.0, 128
        %336 = vxpose.xlu0.b32.cont [7/16] 0.0, 128
        %337 = vxpose.xlu0.b32.cont [8/16] 0.0, 128
        %338 = vxpose.xlu0.b32.cont [9/16] 0.0, 128
        %339 = vxpose.xlu0.b32.cont [10/16] 0.0, 128
        %340 = vxpose.xlu0.b32.cont [11/16] 0.0, 128
        %341 = vxpose.xlu0.b32.cont [12/16] 0.0, 128
        %342 = vxpose.xlu0.b32.cont [13/16] 0.0, 128
        %343 = vxpose.xlu0.b32.cont [14/16] 0.0, 128
        %344 = vxpose.xlu0.b32.cont [15/16] 0.0, 128
        %345 = vxpose.xlu0.b32.end [16/16] 0.0, 128
        %v346 = vpop.trf.xlu0
        %v347 = vpop.trf.xlu0
        %v348 = vpop.trf.xlu0
        %v349 = vpop.trf.xlu0
        %v350 = vpop.trf.xlu0
        %v351 = vpop.trf.xlu0
        %v352 = vpop.trf.xlu0
        %v353 = vpop.trf.xlu0
        %v354 = vpop.trf.xlu0
        %v355 = vpop.trf.xlu0
        %v356 = vpop.trf.xlu0
        %v357 = vpop.trf.xlu0
        %v358 = vpop.trf.xlu0
        %v359 = vpop.trf.xlu0
        %v360 = vpop.trf.xlu0
        %v361 = vpop.trf.xlu0
        %v362 = vld [vmem:[%s285 + $0x2] sm:$0x1]
        %363 = vxpose.xlu0.b32.start [1/16] %v362, 128
        %364 = vxpose.xlu0.b32.cont [2/16] 0.0, 128
        %365 = vxpose.xlu0.b32.cont [3/16] 0.0, 128
        %366 = vxpose.xlu0.b32.cont [4/16] 0.0, 128
        %367 = vxpose.xlu0.b32.cont [5/16] 0.0, 128
        %368 = vxpose.xlu0.b32.cont [6/16] 0.0, 128
        %369 = vxpose.xlu0.b32.cont [7/16] 0.0, 128
        %370 = vxpose.xlu0.b32.cont [8/16] 0.0, 128
        %371 = vxpose.xlu0.b32.cont [9/16] 0.0, 128
        %372 = vxpose.xlu0.b32.cont [10/16] 0.0, 128
        %373 = vxpose.xlu0.b32.cont [11/16] 0.0, 128
        %374 = vxpose.xlu0.b32.cont [12/16] 0.0, 128
        %375 = vxpose.xlu0.b32.cont [13/16] 0.0, 128
        %376 = vxpose.xlu0.b32.cont [14/16] 0.0, 128
        %377 = vxpose.xlu0.b32.cont [15/16] 0.0, 128
        %378 = vxpose.xlu0.b32.end [16/16] 0.0, 128
        %v379 = vpop.trf.xlu0
        %v380 = vpop.trf.xlu0
        %v381 = vpop.trf.xlu0
        %v382 = vpop.trf.xlu0
        %v383 = vpop.trf.xlu0
        %v384 = vpop.trf.xlu0
        %v385 = vpop.trf.xlu0
        %v386 = vpop.trf.xlu0
        %v387 = vpop.trf.xlu0
        %v388 = vpop.trf.xlu0
        %v389 = vpop.trf.xlu0
        %v390 = vpop.trf.xlu0
        %v391 = vpop.trf.xlu0
        %v392 = vpop.trf.xlu0
        %v393 = vpop.trf.xlu0
        %v394 = vpop.trf.xlu0
        %396 = vset.pattern.permute.xlu0 0
        %397 = vperm.xlu0 %396, %v313
        %v398 = vpop.permute.xlu0 %397
        %401 = vset.pattern.permute.xlu0 0
        %402 = vperm.xlu0 %401, %v314
        %v403 = vpop.permute.xlu0 %402
        %406 = vset.pattern.permute.xlu0 0
        %407 = vperm.xlu0 %406, %v315
        %v408 = vpop.permute.xlu0 %407
        %411 = vset.pattern.permute.xlu0 0
        %412 = vperm.xlu0 %411, %v316
        %v413 = vpop.permute.xlu0 %412
        %416 = vset.pattern.permute.xlu0 0
        %417 = vperm.xlu0 %416, %v317
        %v418 = vpop.permute.xlu0 %417
        %421 = vset.pattern.permute.xlu0 0
        %422 = vperm.xlu0 %421, %v318
        %v423 = vpop.permute.xlu0 %422
        %426 = vset.pattern.permute.xlu0 0
        %427 = vperm.xlu0 %426, %v319
        %v428 = vpop.permute.xlu0 %427
        %431 = vset.pattern.permute.xlu0 0
        %432 = vperm.xlu0 %431, %v320
        %v433 = vpop.permute.xlu0 %432
        %436 = vset.pattern.permute.xlu0 0
        %437 = vperm.xlu0 %436, %v321
        %v438 = vpop.permute.xlu0 %437
        %441 = vset.pattern.permute.xlu0 0
        %442 = vperm.xlu0 %441, %v322
        %v443 = vpop.permute.xlu0 %442
        %446 = vset.pattern.permute.xlu0 0
        %447 = vperm.xlu0 %446, %v323
        %v448 = vpop.permute.xlu0 %447
        %451 = vset.pattern.permute.xlu0 0
        %452 = vperm.xlu0 %451, %v324
        %v453 = vpop.permute.xlu0 %452
        %456 = vset.pattern.permute.xlu0 0
        %457 = vperm.xlu0 %456, %v325
        %v458 = vpop.permute.xlu0 %457
        %461 = vset.pattern.permute.xlu0 0
        %462 = vperm.xlu0 %461, %v326
        %v463 = vpop.permute.xlu0 %462
        %466 = vset.pattern.permute.xlu0 0
        %467 = vperm.xlu0 %466, %v327
        %v468 = vpop.permute.xlu0 %467
        %471 = vset.pattern.permute.xlu0 0
        %472 = vperm.xlu0 %471, %v328
        %v473 = vpop.permute.xlu0 %472
        %v475 = vperm.slane %v295, 0
        %v476 = vsub.f32 %v398, %v475
        %v477 = vsub.f32 %v403, %v475
        %v478 = vsub.f32 %v408, %v475
        %v479 = vsub.f32 %v413, %v475
        %v480 = vsub.f32 %v418, %v475
        %v481 = vsub.f32 %v423, %v475
        %v482 = vsub.f32 %v428, %v475
        %v483 = vsub.f32 %v433, %v475
        %v484 = vsub.f32 %v438, %v475
        %v485 = vsub.f32 %v443, %v475
        %v486 = vsub.f32 %v448, %v475
        %v487 = vsub.f32 %v453, %v475
        %v488 = vsub.f32 %v458, %v475
        %v489 = vsub.f32 %v463, %v475
        %v490 = vsub.f32 %v468, %v475
        %v491 = vsub.f32 %v473, %v475
        %v492 = vmul.f32 %v476, %v476
        %v493 = vmul.f32 %v477, %v477
        %v494 = vmul.f32 %v478, %v478
        %v495 = vmul.f32 %v479, %v479
        %v496 = vmul.f32 %v480, %v480
        %v497 = vmul.f32 %v481, %v481
        %v498 = vmul.f32 %v482, %v482
        %v499 = vmul.f32 %v483, %v483
        %v500 = vmul.f32 %v484, %v484
        %v501 = vmul.f32 %v485, %v485
        %v502 = vmul.f32 %v486, %v486
        %v503 = vmul.f32 %v487, %v487
        %v504 = vmul.f32 %v488, %v488
        %v505 = vmul.f32 %v489, %v489
        %v506 = vmul.f32 %v490, %v490
        %v507 = vmul.f32 %v491, %v491
        %509 = vset.pattern.permute.xlu0 0
        %510 = vperm.xlu0 %509, %v346
        %v511 = vpop.permute.xlu0 %510
        %514 = vset.pattern.permute.xlu0 0
        %515 = vperm.xlu0 %514, %v347
        %v516 = vpop.permute.xlu0 %515
        %519 = vset.pattern.permute.xlu0 0
        %520 = vperm.xlu0 %519, %v348
        %v521 = vpop.permute.xlu0 %520
        %524 = vset.pattern.permute.xlu0 0
        %525 = vperm.xlu0 %524, %v349
        %v526 = vpop.permute.xlu0 %525
        %529 = vset.pattern.permute.xlu0 0
        %530 = vperm.xlu0 %529, %v350
        %v531 = vpop.permute.xlu0 %530
        %534 = vset.pattern.permute.xlu0 0
        %535 = vperm.xlu0 %534, %v351
        %v536 = vpop.permute.xlu0 %535
        %539 = vset.pattern.permute.xlu0 0
        %540 = vperm.xlu0 %539, %v352
        %v541 = vpop.permute.xlu0 %540
        %544 = vset.pattern.permute.xlu0 0
        %545 = vperm.xlu0 %544, %v353
        %v546 = vpop.permute.xlu0 %545
        %549 = vset.pattern.permute.xlu0 0
        %550 = vperm.xlu0 %549, %v354
        %v551 = vpop.permute.xlu0 %550
        %554 = vset.pattern.permute.xlu0 0
        %555 = vperm.xlu0 %554, %v355
        %v556 = vpop.permute.xlu0 %555
        %559 = vset.pattern.permute.xlu0 0
        %560 = vperm.xlu0 %559, %v356
        %v561 = vpop.permute.xlu0 %560
        %564 = vset.pattern.permute.xlu0 0
        %565 = vperm.xlu0 %564, %v357
        %v566 = vpop.permute.xlu0 %565
        %569 = vset.pattern.permute.xlu0 0
        %570 = vperm.xlu0 %569, %v358
        %v571 = vpop.permute.xlu0 %570
        %574 = vset.pattern.permute.xlu0 0
        %575 = vperm.xlu0 %574, %v359
        %v576 = vpop.permute.xlu0 %575
        %579 = vset.pattern.permute.xlu0 0
        %580 = vperm.xlu0 %579, %v360
        %v581 = vpop.permute.xlu0 %580
        %584 = vset.pattern.permute.xlu0 0
        %585 = vperm.xlu0 %584, %v361
        %v586 = vpop.permute.xlu0 %585
        %v588 = vperm.slane %v295, 1
        %v589 = vsub.f32 %v511, %v588
        %v590 = vsub.f32 %v516, %v588
        %v591 = vsub.f32 %v521, %v588
        %v592 = vsub.f32 %v526, %v588
        %v593 = vsub.f32 %v531, %v588
        %v594 = vsub.f32 %v536, %v588
        %v595 = vsub.f32 %v541, %v588
        %v596 = vsub.f32 %v546, %v588
        %v597 = vsub.f32 %v551, %v588
        %v598 = vsub.f32 %v556, %v588
        %v599 = vsub.f32 %v561, %v588
        %v600 = vsub.f32 %v566, %v588
        %v601 = vsub.f32 %v571, %v588
        %v602 = vsub.f32 %v576, %v588
        %v603 = vsub.f32 %v581, %v588
        %v604 = vsub.f32 %v586, %v588
        %v605 = vmul.f32 %v589, %v589
        %v606 = vmul.f32 %v590, %v590
        %v607 = vmul.f32 %v591, %v591
        %v608 = vmul.f32 %v592, %v592
        %v609 = vmul.f32 %v593, %v593
        %v610 = vmul.f32 %v594, %v594
        %v611 = vmul.f32 %v595, %v595
        %v612 = vmul.f32 %v596, %v596
        %v613 = vmul.f32 %v597, %v597
        %v614 = vmul.f32 %v598, %v598
        %v615 = vmul.f32 %v599, %v599
        %v616 = vmul.f32 %v600, %v600
        %v617 = vmul.f32 %v601, %v601
        %v618 = vmul.f32 %v602, %v602
        %v619 = vmul.f32 %v603, %v603
        %v620 = vmul.f32 %v604, %v604
        %v621 = vadd.f32 %v492, %v605
        %v622 = vadd.f32 %v493, %v606
        %v623 = vadd.f32 %v494, %v607
        %v624 = vadd.f32 %v495, %v608
        %v625 = vadd.f32 %v496, %v609
        %v626 = vadd.f32 %v497, %v610
        %v627 = vadd.f32 %v498, %v611
        %v628 = vadd.f32 %v499, %v612
        %v629 = vadd.f32 %v500, %v613
        %v630 = vadd.f32 %v501, %v614
        %v631 = vadd.f32 %v502, %v615
        %v632 = vadd.f32 %v503, %v616
        %v633 = vadd.f32 %v504, %v617
        %v634 = vadd.f32 %v505, %v618
        %v635 = vadd.f32 %v506, %v619
        %v636 = vadd.f32 %v507, %v620
        %638 = vset.pattern.permute.xlu0 0
        %639 = vperm.xlu0 %638, %v379
        %v640 = vpop.permute.xlu0 %639
        %643 = vset.pattern.permute.xlu0 0
        %644 = vperm.xlu0 %643, %v380
        %v645 = vpop.permute.xlu0 %644
        %648 = vset.pattern.permute.xlu0 0
        %649 = vperm.xlu0 %648, %v381
        %v650 = vpop.permute.xlu0 %649
        %653 = vset.pattern.permute.xlu0 0
        %654 = vperm.xlu0 %653, %v382
        %v655 = vpop.permute.xlu0 %654
        %658 = vset.pattern.permute.xlu0 0
        %659 = vperm.xlu0 %658, %v383
        %v660 = vpop.permute.xlu0 %659
        %663 = vset.pattern.permute.xlu0 0
        %664 = vperm.xlu0 %663, %v384
        %v665 = vpop.permute.xlu0 %664
        %668 = vset.pattern.permute.xlu0 0
        %669 = vperm.xlu0 %668, %v385
        %v670 = vpop.permute.xlu0 %669
        %673 = vset.pattern.permute.xlu0 0
        %674 = vperm.xlu0 %673, %v386
        %v675 = vpop.permute.xlu0 %674
        %678 = vset.pattern.permute.xlu0 0
        %679 = vperm.xlu0 %678, %v387
        %v680 = vpop.permute.xlu0 %679
        %683 = vset.pattern.permute.xlu0 0
        %684 = vperm.xlu0 %683, %v388
        %v685 = vpop.permute.xlu0 %684
        %688 = vset.pattern.permute.xlu0 0
        %689 = vperm.xlu0 %688, %v389
        %v690 = vpop.permute.xlu0 %689
        %693 = vset.pattern.permute.xlu0 0
        %694 = vperm.xlu0 %693, %v390
        %v695 = vpop.permute.xlu0 %694
        %698 = vset.pattern.permute.xlu0 0
        %699 = vperm.xlu0 %698, %v391
        %v700 = vpop.permute.xlu0 %699
        %703 = vset.pattern.permute.xlu0 0
        %704 = vperm.xlu0 %703, %v392
        %v705 = vpop.permute.xlu0 %704
        %708 = vset.pattern.permute.xlu0 0
        %709 = vperm.xlu0 %708, %v393
        %v710 = vpop.permute.xlu0 %709
        %713 = vset.pattern.permute.xlu0 0
        %714 = vperm.xlu0 %713, %v394
        %v715 = vpop.permute.xlu0 %714
        %v717 = vperm.slane %v295, 2
        %v718 = vsub.f32 %v640, %v717
        %v719 = vsub.f32 %v645, %v717
        %v720 = vsub.f32 %v650, %v717
        %v721 = vsub.f32 %v655, %v717
        %v722 = vsub.f32 %v660, %v717
        %v723 = vsub.f32 %v665, %v717
        %v724 = vsub.f32 %v670, %v717
        %v725 = vsub.f32 %v675, %v717
        %v726 = vsub.f32 %v680, %v717
        %v727 = vsub.f32 %v685, %v717
        %v728 = vsub.f32 %v690, %v717
        %v729 = vsub.f32 %v695, %v717
        %v730 = vsub.f32 %v700, %v717
        %v731 = vsub.f32 %v705, %v717
        %v732 = vsub.f32 %v710, %v717
        %v733 = vsub.f32 %v715, %v717
        %v734 = vmul.f32 %v718, %v718
        %v735 = vmul.f32 %v719, %v719
        %v736 = vmul.f32 %v720, %v720
        %v737 = vmul.f32 %v721, %v721
        %v738 = vmul.f32 %v722, %v722
        %v739 = vmul.f32 %v723, %v723
        %v740 = vmul.f32 %v724, %v724
        %v741 = vmul.f32 %v725, %v725
        %v742 = vmul.f32 %v726, %v726
        %v743 = vmul.f32 %v727, %v727
        %v744 = vmul.f32 %v728, %v728
        %v745 = vmul.f32 %v729, %v729
        %v746 = vmul.f32 %v730, %v730
        %v747 = vmul.f32 %v731, %v731
        %v748 = vmul.f32 %v732, %v732
        %v749 = vmul.f32 %v733, %v733
        %v750 = vadd.f32 %v621, %v734
        %v751 = vadd.f32 %v622, %v735
        %v752 = vadd.f32 %v623, %v736
        %v753 = vadd.f32 %v624, %v737
        %v754 = vadd.f32 %v625, %v738
        %v755 = vadd.f32 %v626, %v739
        %v756 = vadd.f32 %v627, %v740
        %v757 = vadd.f32 %v628, %v741
        %v758 = vadd.f32 %v629, %v742
        %v759 = vadd.f32 %v630, %v743
        %v760 = vadd.f32 %v631, %v744
        %v761 = vadd.f32 %v632, %v745
        %v762 = vadd.f32 %v633, %v746
        %v763 = vadd.f32 %v634, %v747
        %v764 = vadd.f32 %v635, %v748
        %v765 = vadd.f32 %v636, %v749
        %v766 = vlaneseq
        %v767 = vshrl.u32 %v766, 7
        %v768 = vadd.s32 %v767, 8
        %v769 = vadd.s32 %v767, 16
        %v770 = vadd.s32 %v767, 24
        %v771 = vadd.s32 %v767, 32
        %v772 = vadd.s32 %v767, 40
        %v773 = vadd.s32 %v767, 48
        %v774 = vadd.s32 %v767, 56
        %v775 = vadd.s32 %v767, 64
        %v776 = vadd.s32 %v767, 72
        %v777 = vadd.s32 %v767, 80
        %v778 = vadd.s32 %v767, 88
        %v779 = vadd.s32 %v767, 96
        %v780 = vadd.s32 %v767, 104
        %v781 = vadd.s32 %v767, 112
        %v782 = vadd.s32 %v767, 120
        %v783 = vmin.f32 %v750, %v754
        %v784 = vmin.f32 %v751, %v755
        %v785 = vmin.f32 %v752, %v756
        %v786 = vmin.f32 %v753, %v757
        %v787 = vmin.f32 %v783, %v758
        %v788 = vmin.f32 %v784, %v759
        %v789 = vmin.f32 %v785, %v760
        %v790 = vmin.f32 %v786, %v761
        %v791 = vmin.f32 %v787, %v762
        %v792 = vmin.f32 %v788, %v763
        %v793 = vmin.f32 %v789, %v764
        %v794 = vmin.f32 %v790, %v765
        %v795 = vmin.f32 %v791, %v792
        %v796 = vmin.f32 %v793, %v794
        %v797 = vmin.f32 %v795, %v796
        %v798 = vrot.slane %v797, 4
        %v799 = vmin.f32 %v797, %v798
        %v800 = vrot.slane %v799, 2
        %v801 = vmin.f32 %v799, %v800
        %v802 = vrot.slane %v801, 1
        %v803 = vmin.f32 %v801, %v802
        %vm804 = vcmp.eq.f32.partialorder %v750, %v803
        %vm805 = vcmp.eq.f32.partialorder %v751, %v803
        %vm806 = vcmp.eq.f32.partialorder %v752, %v803
        %vm807 = vcmp.eq.f32.partialorder %v753, %v803
        %vm808 = vcmp.eq.f32.partialorder %v754, %v803
        %vm809 = vcmp.eq.f32.partialorder %v755, %v803
        %vm810 = vcmp.eq.f32.partialorder %v756, %v803
        %vm811 = vcmp.eq.f32.partialorder %v757, %v803
        %vm812 = vcmp.eq.f32.partialorder %v758, %v803
        %vm813 = vcmp.eq.f32.partialorder %v759, %v803
        %vm814 = vcmp.eq.f32.partialorder %v760, %v803
        %vm815 = vcmp.eq.f32.partialorder %v761, %v803
        %vm816 = vcmp.eq.f32.partialorder %v762, %v803
        %vm817 = vcmp.eq.f32.partialorder %v763, %v803
        %vm818 = vcmp.eq.f32.partialorder %v764, %v803
        %vm819 = vcmp.eq.f32.partialorder %v765, %v803
        %v820 = vsel %vm804, %v767, 128
        %v821 = vsel %vm805, %v768, 128
        %v822 = vsel %vm806, %v769, 128
        %v823 = vsel %vm807, %v770, 128
        %v824 = vsel %vm808, %v771, 128
        %v825 = vsel %vm809, %v772, 128
        %v826 = vsel %vm810, %v773, 128
        %v827 = vsel %vm811, %v774, 128
        %v828 = vsel %vm812, %v775, 128
        %v829 = vsel %vm813, %v776, 128
        %v830 = vsel %vm814, %v777, 128
        %v831 = vsel %vm815, %v778, 128
        %v832 = vsel %vm816, %v779, 128
        %v833 = vsel %vm817, %v780, 128
        %v834 = vsel %vm818, %v781, 128
        %v835 = vsel %vm819, %v782, 128
        %vm836 = vcmp.lt.s32.totalorder %v820, %v824
        %v837 = vsel %vm836, %v820, %v824
        %vm838 = vcmp.lt.s32.totalorder %v821, %v825
        %v839 = vsel %vm838, %v821, %v825
        %vm840 = vcmp.lt.s32.totalorder %v822, %v826
        %v841 = vsel %vm840, %v822, %v826
        %vm842 = vcmp.lt.s32.totalorder %v823, %v827
        %v843 = vsel %vm842, %v823, %v827
        %vm844 = vcmp.lt.s32.totalorder %v837, %v828
        %v845 = vsel %vm844, %v837, %v828
        %vm846 = vcmp.lt.s32.totalorder %v839, %v829
        %v847 = vsel %vm846, %v839, %v829
        %vm848 = vcmp.lt.s32.totalorder %v841, %v830
        %v849 = vsel %vm848, %v841, %v830
        %vm850 = vcmp.lt.s32.totalorder %v843, %v831
        %v851 = vsel %vm850, %v843, %v831
        %vm852 = vcmp.lt.s32.totalorder %v845, %v832
        %v853 = vsel %vm852, %v845, %v832
        %vm854 = vcmp.lt.s32.totalorder %v847, %v833
        %v855 = vsel %vm854, %v847, %v833
        %vm856 = vcmp.lt.s32.totalorder %v849, %v834
        %v857 = vsel %vm856, %v849, %v834
        %vm858 = vcmp.lt.s32.totalorder %v851, %v835
        %v859 = vsel %vm858, %v851, %v835
        %vm860 = vcmp.lt.s32.totalorder %v853, %v855
        %v861 = vsel %vm860, %v853, %v855
        %vm862 = vcmp.lt.s32.totalorder %v857, %v859
        %v863 = vsel %vm862, %v857, %v859
        %vm864 = vcmp.lt.s32.totalorder %v861, %v863
        %v865 = vsel %vm864, %v861, %v863
        %v866 = vrot.slane %v865, 4
        %vm867 = vcmp.lt.s32.totalorder %v865, %v866
        %v868 = vsel %vm867, %v865, %v866
        %v869 = vrot.slane %v868, 2
        %vm870 = vcmp.lt.s32.totalorder %v868, %v869
        %v871 = vsel %vm870, %v868, %v869
        %v872 = vrot.slane %v871, 1
        %vm873 = vcmp.lt.s32.totalorder %v871, %v872
        %v874 = vsel %vm873, %v871, %v872
        %s875 = smul.u32 %s28, 128
        %v876 = vstv %s875
        %v877 = vadd.s32 %v874, %v876
        %p878 = scmp.eq.s32.totalorder %s28, 0
        // Predicated region
        $region29: #{labeled_chamfer_distance.1} parent=27 // pred_check
          %p879 = pneg %p878
        $region30: #{labeled_chamfer_distance.1} parent=27 // pred_check_branch
          %881 = sbr.rel (%p879) target = $region32
        $region31: #{labeled_chamfer_distance.1} parent=27 // pred_region
          %882 = vst [vmem:[#allocation2] sm:$0x1] inf
          %883 = vst [vmem:[#allocation3] sm:$0x1] 0
        $region32: #{labeled_chamfer_distance.1} parent=27 // pred_fallthru
          _
        %v884 = vld [vmem:[#allocation2] sm:$0x1]
        %vm885 = vcmp.lt.f32.partialorder %v803, %v884
        %v886 = vld [vmem:[#allocation3] sm:$0x1]
        %v887 = vsel %vm885, %v877, %v886
        %888 = vst [vmem:[#allocation3] sm:$0x1] %v887
        %v889 = vld [vmem:[#allocation2] sm:$0x1]
        %v890 = vsel %vm885, %v803, %v889
        %891 = vst [vmem:[#allocation2] sm:$0x1] %v890
        // Predicated region
        $region33: #{labeled_chamfer_distance.1} parent=27 // pred_check
          %p892 = pneg %p878
        $region34: #{labeled_chamfer_distance.1} parent=27 // pred_check_branch
          %894 = sbr.rel (%p892) target = $region36
        $region35: #{labeled_chamfer_distance.1} parent=27 // pred_region
          %v895 = vld [vmem:[#allocation2] sm:$0x1]
          %896 = vst [vmem:[%s288] sm:$0x1] %v895
          %v897 = vld [vmem:[#allocation3] sm:$0x1]
          %898 = vst [vmem:[%s260] sm:$0x1] %v897
        $region36: #{labeled_chamfer_distance.1} parent=27 // pred_fallthru
          _
        %v899 = vlaneseq
        %v900 = vand.u32 %v899, 127
        %901 = vmin.xlane.f32.xlu0 %v750
        %v902 = vpop.xlane.xlu0 %901
        %903 = vmin.xlane.f32.xlu0 %v751
        %v904 = vpop.xlane.xlu0 %903
        %905 = vmin.xlane.f32.xlu0 %v752
        %v906 = vpop.xlane.xlu0 %905
        %907 = vmin.xlane.f32.xlu0 %v753
        %v908 = vpop.xlane.xlu0 %907
        %909 = vmin.xlane.f32.xlu0 %v754
        %v910 = vpop.xlane.xlu0 %909
        %911 = vmin.xlane.f32.xlu0 %v755
        %v912 = vpop.xlane.xlu0 %911
        %913 = vmin.xlane.f32.xlu0 %v756
        %v914 = vpop.xlane.xlu0 %913
        %915 = vmin.xlane.f32.xlu0 %v757
        %v916 = vpop.xlane.xlu0 %915
        %917 = vmin.xlane.f32.xlu0 %v758
        %v918 = vpop.xlane.xlu0 %917
        %919 = vmin.xlane.f32.xlu0 %v759
        %v920 = vpop.xlane.xlu0 %919
        %921 = vmin.xlane.f32.xlu0 %v760
        %v922 = vpop.xlane.xlu0 %921
        %923 = vmin.xlane.f32.xlu0 %v761
        %v924 = vpop.xlane.xlu0 %923
        %925 = vmin.xlane.f32.xlu0 %v762
        %v926 = vpop.xlane.xlu0 %925
        %927 = vmin.xlane.f32.xlu0 %v763
        %v928 = vpop.xlane.xlu0 %927
        %929 = vmin.xlane.f32.xlu0 %v764
        %v930 = vpop.xlane.xlu0 %929
        %931 = vmin.xlane.f32.xlu0 %v765
        %v932 = vpop.xlane.xlu0 %931
        %vm933 = vcmp.eq.f32.partialorder %v750, %v902
        %vm934 = vcmp.eq.f32.partialorder %v751, %v904
        %vm935 = vcmp.eq.f32.partialorder %v752, %v906
        %vm936 = vcmp.eq.f32.partialorder %v753, %v908
        %vm937 = vcmp.eq.f32.partialorder %v754, %v910
        %vm938 = vcmp.eq.f32.partialorder %v755, %v912
        %vm939 = vcmp.eq.f32.partialorder %v756, %v914
        %vm940 = vcmp.eq.f32.partialorder %v757, %v916
        %vm941 = vcmp.eq.f32.partialorder %v758, %v918
        %vm942 = vcmp.eq.f32.partialorder %v759, %v920
        %vm943 = vcmp.eq.f32.partialorder %v760, %v922
        %vm944 = vcmp.eq.f32.partialorder %v761, %v924
        %vm945 = vcmp.eq.f32.partialorder %v762, %v926
        %vm946 = vcmp.eq.f32.partialorder %v763, %v928
        %vm947 = vcmp.eq.f32.partialorder %v764, %v930
        %vm948 = vcmp.eq.f32.partialorder %v765, %v932
        %v949 = vsel %vm933, %v900, 128
        %v950 = vsel %vm934, %v900, 128
        %v951 = vsel %vm935, %v900, 128
        %v952 = vsel %vm936, %v900, 128
        %v953 = vsel %vm937, %v900, 128
        %v954 = vsel %vm938, %v900, 128
        %v955 = vsel %vm939, %v900, 128
        %v956 = vsel %vm940, %v900, 128
        %v957 = vsel %vm941, %v900, 128
        %v958 = vsel %vm942, %v900, 128
        %v959 = vsel %vm943, %v900, 128
        %v960 = vsel %vm944, %v900, 128
        %v961 = vsel %vm945, %v900, 128
        %v962 = vsel %vm946, %v900, 128
        %v963 = vsel %vm947, %v900, 128
        %v964 = vsel %vm948, %v900, 128
        %v965 = vand.u32 %v949, 65535
        %v966 = vshra.s32 %v949, 16
        %v967 = vcvt.s32.f32 %v965
        %v968 = vcvt.s32.f32 %v966
        %969 = vmin.xlane.f32.xlu0 %v968
        %v970 = vpop.xlane.xlu0 %969
        %vm971 = vcmp.eq.f32.partialorder %v968, %v970
        %v972 = vsel %vm971, %v967, inf
        %973 = vmin.xlane.f32.xlu0 %v972
        %v974 = vpop.xlane.xlu0 %973
        %v975 = vcvt.f32.s32 %v974
        %v976 = vcvt.f32.s32 %v970
        %v977 = vshll.u32 %v976, 16
        %v978 = vadd.s32 %v977, %v975
        %v979 = vand.u32 %v950, 65535
        %v980 = vshra.s32 %v950, 16
        %v981 = vcvt.s32.f32 %v979
        %v982 = vcvt.s32.f32 %v980
        %983 = vmin.xlane.f32.xlu0 %v982
        %v984 = vpop.xlane.xlu0 %983
        %vm985 = vcmp.eq.f32.partialorder %v982, %v984
        %v986 = vsel %vm985, %v981, inf
        %987 = vmin.xlane.f32.xlu0 %v986
        %v988 = vpop.xlane.xlu0 %987
        %v989 = vcvt.f32.s32 %v988
        %v990 = vcvt.f32.s32 %v984
        %v991 = vshll.u32 %v990, 16
        %v992 = vadd.s32 %v991, %v989
        %v993 = vand.u32 %v951, 65535
        %v994 = vshra.s32 %v951, 16
        %v995 = vcvt.s32.f32 %v993
        %v996 = vcvt.s32.f32 %v994
        %997 = vmin.xlane.f32.xlu0 %v996
        %v998 = vpop.xlane.xlu0 %997
        %vm999 = vcmp.eq.f32.partialorder %v996, %v998
        %v1000 = vsel %vm999, %v995, inf
        %1001 = vmin.xlane.f32.xlu0 %v1000
        %v1002 = vpop.xlane.xlu0 %1001
        %v1003 = vcvt.f32.s32 %v1002
        %v1004 = vcvt.f32.s32 %v998
        %v1005 = vshll.u32 %v1004, 16
        %v1006 = vadd.s32 %v1005, %v1003
        %v1007 = vand.u32 %v952, 65535
        %v1008 = vshra.s32 %v952, 16
        %v1009 = vcvt.s32.f32 %v1007
        %v1010 = vcvt.s32.f32 %v1008
        %1011 = vmin.xlane.f32.xlu0 %v1010
        %v1012 = vpop.xlane.xlu0 %1011
        %vm1013 = vcmp.eq.f32.partialorder %v1010, %v1012
        %v1014 = vsel %vm1013, %v1009, inf
        %1015 = vmin.xlane.f32.xlu0 %v1014
        %v1016 = vpop.xlane.xlu0 %1015
        %v1017 = vcvt.f32.s32 %v1016
        %v1018 = vcvt.f32.s32 %v1012
        %v1019 = vshll.u32 %v1018, 16
        %v1020 = vadd.s32 %v1019, %v1017
        %v1021 = vand.u32 %v953, 65535
        %v1022 = vshra.s32 %v953, 16
        %v1023 = vcvt.s32.f32 %v1021
        %v1024 = vcvt.s32.f32 %v1022
        %1025 = vmin.xlane.f32.xlu0 %v1024
        %v1026 = vpop.xlane.xlu0 %1025
        %vm1027 = vcmp.eq.f32.partialorder %v1024, %v1026
        %v1028 = vsel %vm1027, %v1023, inf
        %1029 = vmin.xlane.f32.xlu0 %v1028
        %v1030 = vpop.xlane.xlu0 %1029
        %v1031 = vcvt.f32.s32 %v1030
        %v1032 = vcvt.f32.s32 %v1026
        %v1033 = vshll.u32 %v1032, 16
        %v1034 = vadd.s32 %v1033, %v1031
        %v1035 = vand.u32 %v954, 65535
        %v1036 = vshra.s32 %v954, 16
        %v1037 = vcvt.s32.f32 %v1035
        %v1038 = vcvt.s32.f32 %v1036
        %1039 = vmin.xlane.f32.xlu0 %v1038
        %v1040 = vpop.xlane.xlu0 %1039
        %vm1041 = vcmp.eq.f32.partialorder %v1038, %v1040
        %v1042 = vsel %vm1041, %v1037, inf
        %1043 = vmin.xlane.f32.xlu0 %v1042
        %v1044 = vpop.xlane.xlu0 %1043
        %v1045 = vcvt.f32.s32 %v1044
        %v1046 = vcvt.f32.s32 %v1040
        %v1047 = vshll.u32 %v1046, 16
        %v1048 = vadd.s32 %v1047, %v1045
        %v1049 = vand.u32 %v955, 65535
        %v1050 = vshra.s32 %v955, 16
        %v1051 = vcvt.s32.f32 %v1049
        %v1052 = vcvt.s32.f32 %v1050
        %1053 = vmin.xlane.f32.xlu0 %v1052
        %v1054 = vpop.xlane.xlu0 %1053
        %vm1055 = vcmp.eq.f32.partialorder %v1052, %v1054
        %v1056 = vsel %vm1055, %v1051, inf
        %1057 = vmin.xlane.f32.xlu0 %v1056
        %v1058 = vpop.xlane.xlu0 %1057
        %v1059 = vcvt.f32.s32 %v1058
        %v1060 = vcvt.f32.s32 %v1054
        %v1061 = vshll.u32 %v1060, 16
        %v1062 = vadd.s32 %v1061, %v1059
        %v1063 = vand.u32 %v956, 65535
        %v1064 = vshra.s32 %v956, 16
        %v1065 = vcvt.s32.f32 %v1063
        %v1066 = vcvt.s32.f32 %v1064
        %1067 = vmin.xlane.f32.xlu0 %v1066
        %v1068 = vpop.xlane.xlu0 %1067
        %vm1069 = vcmp.eq.f32.partialorder %v1066, %v1068
        %v1070 = vsel %vm1069, %v1065, inf
        %1071 = vmin.xlane.f32.xlu0 %v1070
        %v1072 = vpop.xlane.xlu0 %1071
        %v1073 = vcvt.f32.s32 %v1072
        %v1074 = vcvt.f32.s32 %v1068
        %v1075 = vshll.u32 %v1074, 16
        %v1076 = vadd.s32 %v1075, %v1073
        %v1077 = vand.u32 %v957, 65535
        %v1078 = vshra.s32 %v957, 16
        %v1079 = vcvt.s32.f32 %v1077
        %v1080 = vcvt.s32.f32 %v1078
        %1081 = vmin.xlane.f32.xlu0 %v1080
        %v1082 = vpop.xlane.xlu0 %1081
        %vm1083 = vcmp.eq.f32.partialorder %v1080, %v1082
        %v1084 = vsel %vm1083, %v1079, inf
        %1085 = vmin.xlane.f32.xlu0 %v1084
        %v1086 = vpop.xlane.xlu0 %1085
        %v1087 = vcvt.f32.s32 %v1086
        %v1088 = vcvt.f32.s32 %v1082
        %v1089 = vshll.u32 %v1088, 16
        %v1090 = vadd.s32 %v1089, %v1087
        %v1091 = vand.u32 %v958, 65535
        %v1092 = vshra.s32 %v958, 16
        %v1093 = vcvt.s32.f32 %v1091
        %v1094 = vcvt.s32.f32 %v1092
        %1095 = vmin.xlane.f32.xlu0 %v1094
        %v1096 = vpop.xlane.xlu0 %1095
        %vm1097 = vcmp.eq.f32.partialorder %v1094, %v1096
        %v1098 = vsel %vm1097, %v1093, inf
        %1099 = vmin.xlane.f32.xlu0 %v1098
        %v1100 = vpop.xlane.xlu0 %1099
        %v1101 = vcvt.f32.s32 %v1100
        %v1102 = vcvt.f32.s32 %v1096
        %v1103 = vshll.u32 %v1102, 16
        %v1104 = vadd.s32 %v1103, %v1101
        %v1105 = vand.u32 %v959, 65535
        %v1106 = vshra.s32 %v959, 16
        %v1107 = vcvt.s32.f32 %v1105
        %v1108 = vcvt.s32.f32 %v1106
        %1109 = vmin.xlane.f32.xlu0 %v1108
        %v1110 = vpop.xlane.xlu0 %1109
        %vm1111 = vcmp.eq.f32.partialorder %v1108, %v1110
        %v1112 = vsel %vm1111, %v1107, inf
        %1113 = vmin.xlane.f32.xlu0 %v1112
        %v1114 = vpop.xlane.xlu0 %1113
        %v1115 = vcvt.f32.s32 %v1114
        %v1116 = vcvt.f32.s32 %v1110
        %v1117 = vshll.u32 %v1116, 16
        %v1118 = vadd.s32 %v1117, %v1115
        %v1119 = vand.u32 %v960, 65535
        %v1120 = vshra.s32 %v960, 16
        %v1121 = vcvt.s32.f32 %v1119
        %v1122 = vcvt.s32.f32 %v1120
        %1123 = vmin.xlane.f32.xlu0 %v1122
        %v1124 = vpop.xlane.xlu0 %1123
        %vm1125 = vcmp.eq.f32.partialorder %v1122, %v1124
        %v1126 = vsel %vm1125, %v1121, inf
        %1127 = vmin.xlane.f32.xlu0 %v1126
        %v1128 = vpop.xlane.xlu0 %1127
        %v1129 = vcvt.f32.s32 %v1128
        %v1130 = vcvt.f32.s32 %v1124
        %v1131 = vshll.u32 %v1130, 16
        %v1132 = vadd.s32 %v1131, %v1129
        %v1133 = vand.u32 %v961, 65535
        %v1134 = vshra.s32 %v961, 16
        %v1135 = vcvt.s32.f32 %v1133
        %v1136 = vcvt.s32.f32 %v1134
        %1137 = vmin.xlane.f32.xlu0 %v1136
        %v1138 = vpop.xlane.xlu0 %1137
        %vm1139 = vcmp.eq.f32.partialorder %v1136, %v1138
        %v1140 = vsel %vm1139, %v1135, inf
        %1141 = vmin.xlane.f32.xlu0 %v1140
        %v1142 = vpop.xlane.xlu0 %1141
        %v1143 = vcvt.f32.s32 %v1142
        %v1144 = vcvt.f32.s32 %v1138
        %v1145 = vshll.u32 %v1144, 16
        %v1146 = vadd.s32 %v1145, %v1143
        %v1147 = vand.u32 %v962, 65535
        %v1148 = vshra.s32 %v962, 16
        %v1149 = vcvt.s32.f32 %v1147
        %v1150 = vcvt.s32.f32 %v1148
        %1151 = vmin.xlane.f32.xlu0 %v1150
        %v1152 = vpop.xlane.xlu0 %1151
        %vm1153 = vcmp.eq.f32.partialorder %v1150, %v1152
        %v1154 = vsel %vm1153, %v1149, inf
        %1155 = vmin.xlane.f32.xlu0 %v1154
        %v1156 = vpop.xlane.xlu0 %1155
        %v1157 = vcvt.f32.s32 %v1156
        %v1158 = vcvt.f32.s32 %v1152
        %v1159 = vshll.u32 %v1158, 16
        %v1160 = vadd.s32 %v1159, %v1157
        %v1161 = vand.u32 %v963, 65535
        %v1162 = vshra.s32 %v963, 16
        %v1163 = vcvt.s32.f32 %v1161
        %v1164 = vcvt.s32.f32 %v1162
        %1165 = vmin.xlane.f32.xlu0 %v1164
        %v1166 = vpop.xlane.xlu0 %1165
        %vm1167 = vcmp.eq.f32.partialorder %v1164, %v1166
        %v1168 = vsel %vm1167, %v1163, inf
        %1169 = vmin.xlane.f32.xlu0 %v1168
        %v1170 = vpop.xlane.xlu0 %1169
        %v1171 = vcvt.f32.s32 %v1170
        %v1172 = vcvt.f32.s32 %v1166
        %v1173 = vshll.u32 %v1172, 16
        %v1174 = vadd.s32 %v1173, %v1171
        %v1175 = vand.u32 %v964, 65535
        %v1176 = vshra.s32 %v964, 16
        %v1177 = vcvt.s32.f32 %v1175
        %v1178 = vcvt.s32.f32 %v1176
        %1179 = vmin.xlane.f32.xlu0 %v1178
        %v1180 = vpop.xlane.xlu0 %1179
        %vm1181 = vcmp.eq.f32.partialorder %v1178, %v1180
        %v1182 = vsel %vm1181, %v1177, inf
        %1183 = vmin.xlane.f32.xlu0 %v1182
        %v1184 = vpop.xlane.xlu0 %1183
        %v1185 = vcvt.f32.s32 %v1184
        %v1186 = vcvt.f32.s32 %v1180
        %v1187 = vshll.u32 %v1186, 16
        %v1188 = vadd.s32 %v1187, %v1185
        %v1205 = vperm.slane %v902, %v900
        %v1206 = vadd.s32 %v900, 4294967288
        %v1207 = vperm.slane %v904, %v1206
        %vm1208 = vcmask 130112
        %v1209 = vsel %vm1208, %v1207, %v1205
        %v1210 = vadd.s32 %v900, 4294967280
        %v1211 = vperm.slane %v906, %v1210
        %vm1212 = vcmask 195712
        %v1213 = vsel %vm1212, %v1211, %v1209
        %v1214 = vadd.s32 %v900, 4294967272
        %v1215 = vperm.slane %v908, %v1214
        %vm1216 = vcmask 261312
        %v1217 = vsel %vm1216, %v1215, %v1213
        %v1218 = vadd.s32 %v900, 4294967264
        %v1219 = vperm.slane %v910, %v1218
        %vm1220 = vcmask 326912
        %v1221 = vsel %vm1220, %v1219, %v1217
        %v1222 = vadd.s32 %v900, 4294967256
        %v1223 = vperm.slane %v912, %v1222
        %vm1224 = vcmask 392512
        %v1225 = vsel %vm1224, %v1223, %v1221
        %v1226 = vadd.s32 %v900, 4294967248
        %v1227 = vperm.slane %v914, %v1226
        %vm1228 = vcmask 458112
        %v1229 = vsel %vm1228, %v1227, %v1225
        %v1230 = vadd.s32 %v900, 4294967240
        %v1231 = vperm.slane %v916, %v1230
        %vm1232 = vcmask 523712
        %v1233 = vsel %vm1232, %v1231, %v1229
        %v1234 = vadd.s32 %v900, 4294967232
        %v1235 = vperm.slane %v918, %v1234
        %vm1236 = vcmask 589312
        %v1237 = vsel %vm1236, %v1235, %v1233
        %v1238 = vadd.s32 %v900, 4294967224
        %v1239 = vperm.slane %v920, %v1238
        %vm1240 = vcmask 654912
        %v1241 = vsel %vm1240, %v1239, %v1237
        %v1242 = vadd.s32 %v900, 4294967216
        %v1243 = vperm.slane %v922, %v1242
        %vm1244 = vcmask 720512
        %v1245 = vsel %vm1244, %v1243, %v1241
        %v1246 = vadd.s32 %v900, 4294967208
        %v1247 = vperm.slane %v924, %v1246
        %vm1248 = vcmask 786112
        %v1249 = vsel %vm1248, %v1247, %v1245
        %v1250 = vadd.s32 %v900, 4294967200
        %v1251 = vperm.slane %v926, %v1250
        %vm1252 = vcmask 851712
        %v1253 = vsel %vm1252, %v1251, %v1249
        %v1254 = vadd.s32 %v900, 4294967192
        %v1255 = vperm.slane %v928, %v1254
        %vm1256 = vcmask 917312
        %v1257 = vsel %vm1256, %v1255, %v1253
        %v1258 = vadd.s32 %v900, 4294967184
        %v1259 = vperm.slane %v930, %v1258
        %vm1260 = vcmask 982912
        %v1261 = vsel %vm1260, %v1259, %v1257
        %v1262 = vadd.s32 %v900, 4294967176
        %v1263 = vperm.slane %v932, %v1262
        %vm1264 = vcmask 1048512
        %v1265 = vsel %vm1264, %v1263, %v1261
        %1267 = vst [vmem:[%s294] sm:$0x1] %v1265
        %v1268 = vperm.slane %v978, %v900
        %v1269 = vperm.slane %v992, %v1206
        %v1270 = vsel %vm1208, %v1269, %v1268
        %v1271 = vperm.slane %v1006, %v1210
        %v1272 = vsel %vm1212, %v1271, %v1270
        %v1273 = vperm.slane %v1020, %v1214
        %v1274 = vsel %vm1216, %v1273, %v1272
        %v1275 = vperm.slane %v1034, %v1218
        %v1276 = vsel %vm1220, %v1275, %v1274
        %v1277 = vperm.slane %v1048, %v1222
        %v1278 = vsel %vm1224, %v1277, %v1276
        %v1279 = vperm.slane %v1062, %v1226
        %v1280 = vsel %vm1228, %v1279, %v1278
        %v1281 = vperm.slane %v1076, %v1230
        %v1282 = vsel %vm1232, %v1281, %v1280
        %v1283 = vperm.slane %v1090, %v1234
        %v1284 = vsel %vm1236, %v1283, %v1282
        %v1285 = vperm.slane %v1104, %v1238
        %v1286 = vsel %vm1240, %v1285, %v1284
        %v1287 = vperm.slane %v1118, %v1242
        %v1288 = vsel %vm1244, %v1287, %v1286
        %v1289 = vperm.slane %v1132, %v1246
        %v1290 = vsel %vm1248, %v1289, %v1288
        %v1291 = vperm.slane %v1146, %v1250
        %v1292 = vsel %vm1252, %v1291, %v1290
        %v1293 = vperm.slane %v1160, %v1254
        %v1294 = vsel %vm1256, %v1293, %v1292
        %v1295 = vperm.slane %v1174, %v1258
        %v1296 = vsel %vm1260, %v1295, %v1294
        %v1297 = vperm.slane %v1188, %v1262
        %v1298 = vsel %vm1264, %v1297, %v1296
        %1299 = vst [vmem:[%s274] sm:$0x1] %v1298
        %p1300 = scmp.lt.s32.totalorder %s27, 1
        %s1301 = scalar_select %p1300, %s27, 1
        %s1302 = scalar_lea.vmem %s2, %s1301
        %s1303 = sand.u32 %s123, 1
        %s1304 = scalar_lea.sflag [#allocation5], %s1303
        %s1305 = sand.u32 %s123, 1
        %s1306 = scalar_lea.vmem [#allocation4], %s1305
        %p1307 = scmp.lt.s32.totalorder %s27, 1
        %s1308 = scalar_select %p1307, %s27, 1
        %p1309 = scmp.lt.s32.totalorder %s28, 0
        %s1310 = scalar_select %p1309, %s28, 0
        %s1311 = sadd.s32 %s1310, %s1308
        %s1312 = scalar_lea.vmem %s4, %s1311
        %s1313 = sand.u32 %s179, 1
        %s1314 = scalar_lea.sflag [#allocation7], %s1313
        %s1315 = sand.u32 %s179, 1
        %s1316 = scalar_lea.vmem [#allocation6], %s1315
        // Predicated region
        $region37: #{labeled_chamfer_distance.1} parent=27 // pred_check
          %p1317 = pneg %p107
        $region38: #{labeled_chamfer_distance.1} parent=27 // pred_check_branch
          %1319 = sbr.rel (%p1317) target = $region40
        $region39: #{labeled_chamfer_distance.1} parent=27 // pred_region
          _
        $region40: #{labeled_chamfer_distance.1} parent=27 // pred_fallthru
          _
        // Predicated region
        $region41: #{labeled_chamfer_distance.1} parent=27 // pred_check
          %p1320 = pneg %p133
        $region42: #{labeled_chamfer_distance.1} parent=27 // pred_check_branch
          %1322 = sbr.rel (%p1320) target = $region44
        $region43: #{labeled_chamfer_distance.1} parent=27 // pred_region
          %1324 = vsyncadd %s1304, 0
          %s1325 = scalar_lea.hbm %s3, %s27
          %s1327 = sshll.u32 %s1306, 4
          %s1328 = int_to_ptr.vmem [resolvable:$true] %s1327
          %s1329 = sshll.u32 %s1325, 4
          %s1330 = int_to_ptr.hbm [resolvable:$true] %s1329
          %1332 = dma.vmem_to_hbm [thread:$0]  %s1328, 16, %s1330, %s1304
        $region44: #{labeled_chamfer_distance.1} parent=27 // pred_fallthru
          _
        // Predicated region
        $region45: #{labeled_chamfer_distance.1} parent=27 // pred_check
          %p1333 = pneg %p161
        $region46: #{labeled_chamfer_distance.1} parent=27 // pred_check_branch
          %1335 = sbr.rel (%p1333) target = $region48
        $region47: #{labeled_chamfer_distance.1} parent=27 // pred_region
          _
        $region48: #{labeled_chamfer_distance.1} parent=27 // pred_fallthru
          _
        // Predicated region
        $region49: #{labeled_chamfer_distance.1} parent=27 // pred_check
          %p1336 = pneg %p189
        $region50: #{labeled_chamfer_distance.1} parent=27 // pred_check_branch
          %1338 = sbr.rel (%p1336) target = $region52
        $region51: #{labeled_chamfer_distance.1} parent=27 // pred_region
          %1340 = vsyncadd %s1314, 0
          %s1341 = sadd.s32 %s28, %s27
          %s1342 = scalar_lea.hbm %s5, %s1341
          %s1344 = sshll.u32 %s1316, 4
          %s1345 = int_to_ptr.vmem [resolvable:$true] %s1344
          %s1346 = sshll.u32 %s1342, 4
          %s1347 = int_to_ptr.hbm [resolvable:$true] %s1346
          %1349 = dma.vmem_to_hbm [thread:$0]  %s1345, 16, %s1347, %s1314
        $region52: #{labeled_chamfer_distance.1} parent=27 // pred_fallthru
          _
      $region28: #{labeled_chamfer_distance.1} parent=5 // pred_fallthru
        _
      %p1350 = scmp.le.s32.totalorder 2, %s18
      // Predicated region
      $region53: #{labeled_chamfer_distance.1} parent=5 // pred_check
        %p1351 = pneg %p1350
      $region54: #{labeled_chamfer_distance.1} parent=5 // pred_check_branch
        %1353 = sbr.rel (%p1351) target = $region56
      $region55: #{labeled_chamfer_distance.1} parent=5 // pred_region
        %s1354 = ssub.s32 %s18, 2
        // Predicated region
        $region57: #{labeled_chamfer_distance.1} parent=55 // pred_check
          %p1355 = pneg %p113
        $region58: #{labeled_chamfer_distance.1} parent=55 // pred_check_branch
          %1357 = sbr.rel (%p1355) target = $region60
        $region59: #{labeled_chamfer_distance.1} parent=55 // pred_region
          %p1358 = scmp.lt.s32.totalorder %s29, 1
          %s1359 = scalar_select %p1358, %s29, 1
          %s1360 = scalar_lea.vmem %s2, %s1359
        $region60: #{labeled_chamfer_distance.1} parent=55 // pred_fallthru
          _
        // Predicated region
        $region61: #{labeled_chamfer_distance.1} parent=55 // pred_check
          %p1361 = pneg %p139
        $region62: #{labeled_chamfer_distance.1} parent=55 // pred_check_branch
          %1363 = sbr.rel (%p1361) target = $region64
        $region63: #{labeled_chamfer_distance.1} parent=55 // pred_region
          %s1364 = sand.u32 %s124, 1
          %s1365 = scalar_lea.sflag [#allocation5], %s1364
          %s1366 = sand.u32 %s124, 1
          %s1367 = scalar_lea.vmem [#allocation4], %s1366
          %1369 = dma.done %s1365, 16
        $region64: #{labeled_chamfer_distance.1} parent=55 // pred_fallthru
          _
        // Predicated region
        $region65: #{labeled_chamfer_distance.1} parent=55 // pred_check
          %p1370 = pneg %p167
        $region66: #{labeled_chamfer_distance.1} parent=55 // pred_check_branch
          %1372 = sbr.rel (%p1370) target = $region68
        $region67: #{labeled_chamfer_distance.1} parent=55 // pred_region
          %p1373 = scmp.lt.s32.totalorder %s29, 1
          %s1374 = scalar_select %p1373, %s29, 1
          %p1375 = scmp.lt.s32.totalorder %s30, 0
          %s1376 = scalar_select %p1375, %s30, 0
          %s1377 = sadd.s32 %s1376, %s1374
          %s1378 = scalar_lea.vmem %s4, %s1377
        $region68: #{labeled_chamfer_distance.1} parent=55 // pred_fallthru
          _
        // Predicated region
        $region69: #{labeled_chamfer_distance.1} parent=55 // pred_check
          %p1379 = pneg %p195
        $region70: #{labeled_chamfer_distance.1} parent=55 // pred_check_branch
          %1381 = sbr.rel (%p1379) target = $region72
        $region71: #{labeled_chamfer_distance.1} parent=55 // pred_region
          %s1382 = sand.u32 %s180, 1
          %s1383 = scalar_lea.sflag [#allocation7], %s1382
          %s1384 = sand.u32 %s180, 1
          %s1385 = scalar_lea.vmem [#allocation6], %s1384
          %1387 = dma.done %s1383, 16
        $region72: #{labeled_chamfer_distance.1} parent=55 // pred_fallthru
          _
      $region56: #{labeled_chamfer_distance.1} parent=5 // pred_fallthru
        _
    $region6: #{labeled_chamfer_distance.1} parent=1 // loop_footer
      %s22 = sadd.s32 1, %s18
    $region7: #{labeled_chamfer_distance.1} parent=1 // loop_footer_branch
      %17 = sbr.rel target = $region3
    $region8: #{labeled_chamfer_distance.1} parent=1 // loop_exit
      _
    %1388 = vsyncpa [#allocation5], 1
    %s1389 = scalar_lea.sflag [#allocation5], 1
    %1390 = vsyncpa %s1389, 1
    %1391 = vsyncpa [#allocation7], 1
    %s1392 = scalar_lea.sflag [#allocation7], 1
    %1393 = vsyncpa %s1392, 1

</llo_original>
